<compile_context>
chip_gen: v7x
topology: tpu7x:2x2x1
jax: 0.10.0
libtpu: 0.0.40
codegen_flags: <defaults>
</compile_context>

<pallas_src>
import functools
import math

import jax
import jax.numpy as jnp
import numpy as np
from jax import lax
from jax.experimental import pallas as pl
from jax.experimental.pallas import tpu as pltpu

_NT = (((1,), (1,)), ((), ()))   # contract last dims of both operands (A @ B^T)
_TN = (((0,), (0,)), ((), ()))   # contract first dims of both operands (A^T @ B)


def _layernorm(x, g, b, eps=1e-5):
    mu = jnp.mean(x, axis=-1, keepdims=True)
    xc = x - mu
    var = jnp.mean(xc * xc, axis=-1, keepdims=True)
    return xc * lax.rsqrt(var + eps) * g + b


# ---------------------------------------------------------------------------
# Kernel A: attn1 (tokens -> image) with online softmax over streamed Nk tiles,
#           then residual+LN2, MLP, residual+LN3 on the last tile.
# ---------------------------------------------------------------------------
def _queries_kernel(
    q_in_ref, keys_ref, key_pe_ref,
    w_qkv1_ref, b_qkv1_ref, wo1_ref, bo1_ref,
    ln_g_ref, ln_b_ref, wm1_ref, bm1_ref, wm2_ref, bm2_ref,
    q_out_ref, score_ref,
    q1_scr, m_scr, l_scr, acc_scr,
    *, num_heads,
):
    f32 = jnp.float32
    bf16 = jnp.bfloat16
    nk = pl.program_id(1)
    n_nk = pl.num_programs(1)

    D, C = wo1_ref.shape
    dh = D // num_heads
    scale = 1.0 / math.sqrt(dh)

    w_qkv1 = w_qkv1_ref[...]          # (C, 3D) bf16
    b_qkv1 = b_qkv1_ref[...]          # (1, 3D) f32

    # ---- init per-batch state: q projection + online-softmax accumulators ----
    @pl.when(nk == 0)
    def _():
        q = q_in_ref[0]
        q1_scr[...] = (jnp.dot(q.astype(bf16), w_qkv1[:, 0:D],
                               preferred_element_type=f32) + b_qkv1[:, 0:D])
        m_scr[...] = jnp.full_like(m_scr, -jnp.inf)
        l_scr[...] = jnp.zeros_like(l_scr)
        acc_scr[...] = jnp.zeros_like(acc_scr)

    # ---- per-tile K / V projections ----
    keys_t = keys_ref[0]                               # (tk, C) f32
    kin_t = keys_t + key_pe_ref[0]                     # keys + key_pe
    k1 = (jnp.dot(kin_t.astype(bf16), w_qkv1[:, D:2 * D],
                  preferred_element_type=f32) + b_qkv1[:, D:2 * D])       # (tk, D)
    v1 = (jnp.dot(keys_t.astype(bf16), w_qkv1[:, 2 * D:3 * D],
                  preferred_element_type=f32) + b_qkv1[:, 2 * D:3 * D])   # (tk, D)

    # ---- online-softmax attention per head; state lives in VMEM scratch ----
    for h in range(num_heads):
        hs = slice(h * dh, (h + 1) * dh)
        qh = q1_scr[:, hs]                             # (Nq, dh)
        kh = k1[:, hs]                                 # (tk, dh)
        vh = v1[:, hs]                                 # (tk, dh)
        s = lax.dot_general(qh, kh, _NT, preferred_element_type=f32) * scale   # (Nq, tk)
        score_ref[0, h] = s                            # pre-softmax scaled logits (this tile)

        m_prev = m_scr[:, h:h + 1]                     # (Nq, 1)
        m_new = jnp.maximum(m_prev, jnp.max(s, axis=-1, keepdims=True))
        alpha = jnp.exp(m_prev - m_new)
        p = jnp.exp(s - m_new)                         # (Nq, tk)
        l_scr[:, h:h + 1] = alpha * l_scr[:, h:h + 1] + jnp.sum(p, axis=-1, keepdims=True)
        acc_scr[:, hs] = alpha * acc_scr[:, hs] + jnp.dot(p, vh, preferred_element_type=f32)
        m_scr[:, h:h + 1] = m_new

    # ---- finalize on last Nk tile: normalize, one fused (Nq,D)@(D,C) output
    #      projection, residual+LN2, MLP, residual+LN3 ----
    @pl.when(nk == n_nk - 1)
    def _():
        inv_l = pl.reciprocal(l_scr[...], approx=True)           # (Nq, H) on EUP
        for h in range(num_heads):
            hs = slice(h * dh, (h + 1) * dh)
            acc_scr[:, hs] = acc_scr[:, hs] * inv_l[:, h:h + 1]
        attn_out = (jnp.dot(acc_scr[...].astype(bf16), wo1_ref[...],
                            preferred_element_type=f32) + bo1_ref[...])   # heads folded: one K=D matmul

        ln_g = ln_g_ref[...]                           # (2, C): [gamma2; gamma3]
        ln_b = ln_b_ref[...]
        x = _layernorm(q_in_ref[0] + attn_out, ln_g[0:1], ln_b[0:1])      # norm2
        hidden = jnp.maximum(
            jnp.dot(x.astype(bf16), wm1_ref[...], preferred_element_type=f32) + bm1_ref[...], 0.0)
        mlp_out = jnp.dot(hidden.astype(bf16), wm2_ref[...],
                          preferred_element_type=f32) + bm2_ref[...]
        x = _layernorm(x + mlp_out, ln_g[1:2], ln_b[1:2])                 # norm3
        q_out_ref[0] = x.astype(q_out_ref.dtype)


# ---------------------------------------------------------------------------
# Kernel B: attn2 (image -> tokens) + residual + LN4, one Nk tile per step.
# Softmax axis is Nq (fully resident), so tiles are independent.
# Transposed-logits formulation keeps the big Nk dim lane-dense.
# ---------------------------------------------------------------------------
def _keys_kernel(
    x_ref, keys_ref, key_pe_ref,
    wq2_ref, bq2_ref, w_kv2_ref, b_kv2_ref, wo2_ref, bo2_ref, g4_ref, b4_ref,
    keys_out_ref,
    oh_scr,
    *, num_heads,
):
    f32 = jnp.float32
    bf16 = jnp.bfloat16

    D, C = wo2_ref.shape
    dh = D // num_heads
    scale = 1.0 / math.sqrt(dh)

    x = x_ref[0]                                       # (Nq, C) updated queries
    kv2 = (jnp.dot(x.astype(bf16), w_kv2_ref[...],     # fused K|V projection (same input)
                   preferred_element_type=f32) + b_kv2_ref[...])          # (Nq, 2D)

    keys_t = keys_ref[0]                               # (tk, C)
    kin_t = keys_t + key_pe_ref[0]
    q2 = (jnp.dot(kin_t.astype(bf16), wq2_ref[...],
                  preferred_element_type=f32) + bq2_ref[...])             # (tk, D)

    for h in range(num_heads):
        hs = slice(h * dh, (h + 1) * dh)
        qh = q2[:, hs]                                 # (tk, dh)
        kh = kv2[:, hs]                                # (Nq, dh)
        vh = kv2[:, D + h * dh:D + (h + 1) * dh]       # (Nq, dh)
        # logits transposed: (Nq, tk), Nk lane-dense; softmax over sublane axis 0
        s_t = lax.dot_general(kh, qh, _NT, preferred_element_type=f32) * scale
        m = jnp.max(s_t, axis=0, keepdims=True)        # (1, tk) — XLU sublane reduce
        p = jnp.exp(s_t - m)
        denom = jnp.sum(p, axis=0, keepdims=True)
        p = p * pl.reciprocal(denom, approx=True)
        # oh = p^T @ v without materializing the transpose
        oh_scr[:, hs] = lax.dot_general(p, vh, _TN, preferred_element_type=f32)   # (tk, dh)

    attn_out2 = (jnp.dot(oh_scr[...].astype(bf16), wo2_ref[...],
                         preferred_element_type=f32) + bo2_ref[...])      # heads folded
    keys_new = _layernorm(keys_t + attn_out2, g4_ref[...], b4_ref[...])   # norm4
    keys_out_ref[0] = keys_new.astype(keys_out_ref.dtype)


# ---------------------------------------------------------------------------
# Wrapper
# ---------------------------------------------------------------------------
def _pick_nk_tile(nk):
    for t in (512, 256, 128):
        if nk % t == 0:
            return t
    return nk                       # small / non-divisible: keep Nk fully resident


def _vmem_limit_bytes():
    # ~3/4 of physical VMEM per generation (96 MiB on v5e/v6e, 48 MiB on v7x)
    try:
        cap = getattr(pltpu.get_tpu_info(), "vmem_capacity_bytes", None)
        if cap:
            return int(cap) * 3 // 4
    except Exception:
        pass
    return 64 * 1024 * 1024


def two_way_attention_block(queries, keys, key_pe, params, num_heads):
    B, Nq, C = queries.shape
    _, Nk, _ = keys.shape
    H = num_heads
    D = params["a1_wq"].shape[1]
    assert D % num_heads == 0, "num_heads must divide the internal (downsampled) dim"

    tk = _pick_nk_tile(Nk)
    T = Nk // tk
    bf16 = jnp.bfloat16
    vmem_limit = _vmem_limit_bytes()

    # ---------------- pass 1: attn1 + MLP path → updated queries, score ----------------
    w_qkv1 = jnp.concatenate([params["a1_wq"], params["a1_wk"], params["a1_wv"]], axis=1).astype(bf16)
    b_qkv1 = jnp.concatenate([params["a1_bq"], params["a1_bk"], params["a1_bv"]], axis=1)
    wA = [w_qkv1, b_qkv1,
          params["a1_wo"].astype(bf16), params["a1_bo"],
          jnp.concatenate([params["g2"], params["g3"]], axis=0),
          jnp.concatenate([params["b2"], params["b3"]], axis=0),
          params["wm1"].astype(bf16), params["bm1"],
          params["wm2"].astype(bf16), params["bm2"]]

    in_specs_a = [
        pl.BlockSpec((1, Nq, C), lambda b, n: (b, 0, 0)),     # queries: grid-invariant over Nk
        pl.BlockSpec((1, tk, C), lambda b, n: (b, n, 0)),     # keys tile
        pl.BlockSpec((1, tk, C), lambda b, n: (b, n, 0)),     # key_pe tile
    ] + [pl.BlockSpec(w.shape, lambda b, n: (0, 0)) for w in wA]   # weights: fetched once

    out_shape_a = (
        jax.ShapeDtypeStruct((B, Nq, C), jnp.float32),
        jax.ShapeDtypeStruct((B, H, Nq, Nk), jnp.float32),
    )
    out_specs_a = (
        pl.BlockSpec((1, Nq, C), lambda b, n: (b, 0, 0)),           # written on last Nk tile
        pl.BlockSpec((1, H, Nq, tk), lambda b, n: (b, 0, 0, n)),    # per-tile score logits
    )
    scratch_a = [
        pltpu.VMEM((Nq, D), jnp.float32),   # q projection (computed once per batch)
        pltpu.VMEM((Nq, H), jnp.float32),   # running max per (row, head)
        pltpu.VMEM((Nq, H), jnp.float32),   # running sum per (row, head)
        pltpu.VMEM((Nq, D), jnp.float32),   # running weighted-V accumulator
    ]

    queries_new, score = pl.pallas_call(
        functools.partial(_queries_kernel, num_heads=num_heads),
        grid=(B, T),
        in_specs=in_specs_a,
        out_specs=out_specs_a,
        out_shape=out_shape_a,
        scratch_shapes=scratch_a,
        compiler_params=pltpu.CompilerParams(
            dimension_semantics=("parallel", "arbitrary"),
            vmem_limit_bytes=vmem_limit),
    )(queries, keys, key_pe, *wA)

    # ---------------- pass 2: attn2 + LN4 → updated keys (independent Nk tiles) ----------------
    w_kv2 = jnp.concatenate([params["a2_wk"], params["a2_wv"]], axis=1).astype(bf16)
    b_kv2 = jnp.concatenate([params["a2_bk"], params["a2_bv"]], axis=1)
    wB = [params["a2_wq"].astype(bf16), params["a2_bq"],
          w_kv2, b_kv2,
          params["a2_wo"].astype(bf16), params["a2_bo"],
          params["g4"], params["b4"]]

    in_specs_b = [
        pl.BlockSpec((1, Nq, C), lambda b, n: (b, 0, 0)),     # final queries
        pl.BlockSpec((1, tk, C), lambda b, n: (b, n, 0)),     # keys tile
        pl.BlockSpec((1, tk, C), lambda b, n: (b, n, 0)),     # key_pe tile
    ] + [pl.BlockSpec(w.shape, lambda b, n: (0, 0)) for w in wB]

    keys_new = pl.pallas_call(
        functools.partial(_keys_kernel, num_heads=num_heads),
        grid=(B, T),
        in_specs=in_specs_b,
        out_specs=pl.BlockSpec((1, tk, C), lambda b, n: (b, n, 0)),
        out_shape=jax.ShapeDtypeStruct((B, Nk, C), jnp.float32),
        scratch_shapes=[pltpu.VMEM((tk, D), jnp.float32)],    # per-head output slab
        compiler_params=pltpu.CompilerParams(
            dimension_semantics=("parallel", "arbitrary"),
            vmem_limit_bytes=vmem_limit),
    )(queries_new, keys, key_pe, *wB)

    return queries_new, keys_new, score


# ---------------------------------------------------------------------------
# Deterministic parameter construction (synthetic — not a checkpoint)
# ---------------------------------------------------------------------------
def init_params(key, C, mlp_dim, downsample_rate=2):
    D = C // downsample_rate
    ks = iter(jax.random.split(key, 40))

    def w(shape, scale=0.05):
        return (scale * jax.random.normal(next(ks), shape)).astype(jnp.float32)

    p = {}
    for pref in ("a1_", "a2_"):
        p[pref + "wq"] = w((C, D)); p[pref + "bq"] = w((1, D), 0.02)
        p[pref + "wk"] = w((C, D)); p[pref + "bk"] = w((1, D), 0.02)
        p[pref + "wv"] = w((C, D)); p[pref + "bv"] = w((1, D), 0.02)
        p[pref + "wo"] = w((D, C)); p[pref + "bo"] = w((1, C), 0.02)
    for n in ("2", "3", "4"):
        p["g" + n] = jnp.ones((1, C), jnp.float32)
        p["b" + n] = jnp.zeros((1, C), jnp.float32)
    p["wm1"] = w((C, mlp_dim)); p["bm1"] = w((1, mlp_dim), 0.02)
    p["wm2"] = w((mlp_dim, C)); p["bm2"] = w((1, C), 0.02)
    return p


# ---------------------------------------------------------------------------
# Pure-JAX f32 reference (same math as the PyTorch module) for verification
# ---------------------------------------------------------------------------
def reference(queries, keys, key_pe, p, num_heads):
    def attn(q_in, k_in, v_in, pref):
        q = q_in @ p[pref + "wq"] + p[pref + "bq"]
        k = k_in @ p[pref + "wk"] + p[pref + "bk"]
        v = v_in @ p[pref + "wv"] + p[pref + "bv"]
        B, Nq, D = q.shape
        Nk = k.shape[1]
        dh = D // num_heads
        qh = q.reshape(B, Nq, num_heads, dh).transpose(0, 2, 1, 3)
        kh = k.reshape(B, Nk, num_heads, dh).transpose(0, 2, 1, 3)
        vh = v.reshape(B, Nk, num_heads, dh).transpose(0, 2, 1, 3)
        s = jnp.einsum("bhqd,bhkd->bhqk", qh, kh) / math.sqrt(dh)
        a = jax.nn.softmax(s, axis=-1)
        o = jnp.einsum("bhqk,bhkd->bhqd", a, vh)
        o = o.transpose(0, 2, 1, 3).reshape(B, Nq, D)
        return o @ p[pref + "wo"] + p[pref + "bo"], s

    def ln(x, g, b):
        mu = x.mean(-1, keepdims=True)
        xc = x - mu
        var = (xc * xc).mean(-1, keepdims=True)
        return xc * jax.lax.rsqrt(var + 1e-5) * g + b

    k = keys + key_pe
    ao, score = attn(queries, k, keys, "a1_")
    x = ln(queries + ao, p["g2"], p["b2"])
    m = jnp.maximum(x @ p["wm1"] + p["bm1"], 0.0) @ p["wm2"] + p["bm2"]
    x = ln(x + m, p["g3"], p["b3"])
    ao2, _ = attn(keys + key_pe, x, x, "a2_")
    kk = ln(keys + ao2, p["g4"], p["b4"])
    return x, kk, score


if __name__ == "__main__":
    B, Nq, Nk, C = 2, 8, 16, 32
    num_heads = 2
    mlp_dim = 64

    key = jax.random.PRNGKey(0)
    kq, kk_, kpe, kp = jax.random.split(key, 4)
    queries = jax.random.normal(kq, (B, Nq, C), jnp.float32)
    keys = jax.random.normal(kk_, (B, Nk, C), jnp.float32)
    key_pe = jax.random.normal(kpe, (B, Nk, C), jnp.float32)
    params = init_params(kp, C, mlp_dim, downsample_rate=2)

    q_out, k_out, score = two_way_attention_block(queries, keys, key_pe, params, num_heads)
    jax.block_until_ready((q_out, k_out, score))

    q_ref, k_ref, s_ref = reference(queries, keys, key_pe, params, num_heads)
    # Kernel runs the projection/MLP matmuls with bf16 inputs (f32 accumulation)
    # and uses the approximate EUP reciprocal for softmax normalization, so
    # compare against the f32 reference with correspondingly relaxed tolerances.
    np.testing.assert_allclose(np.asarray(q_out), np.asarray(q_ref), atol=2e-2, rtol=2e-2)
    np.testing.assert_allclose(np.asarray(k_out), np.asarray(k_ref), atol=2e-2, rtol=2e-2)
    np.testing.assert_allclose(np.asarray(score), np.asarray(s_ref), atol=2e-2, rtol=2e-2)

    print("KERNEL_OK")
</pallas_src>

<mosaic_0001>
module attributes {stable_mosaic.version = 11 : i64} {
  func.func @_queries_kernel(%arg0: i32, %arg1: i32, %arg2: memref<1x8x32xf32, #tpu.memory_space<vmem>>, %arg3: memref<1x16x32xf32, #tpu.memory_space<vmem>>, %arg4: memref<1x16x32xf32, #tpu.memory_space<vmem>>, %arg5: memref<32x48xbf16, #tpu.memory_space<vmem>>, %arg6: memref<1x48xf32, #tpu.memory_space<vmem>>, %arg7: memref<16x32xbf16, #tpu.memory_space<vmem>>, %arg8: memref<1x32xf32, #tpu.memory_space<vmem>>, %arg9: memref<2x32xf32, #tpu.memory_space<vmem>>, %arg10: memref<2x32xf32, #tpu.memory_space<vmem>>, %arg11: memref<32x64xbf16, #tpu.memory_space<vmem>>, %arg12: memref<1x64xf32, #tpu.memory_space<vmem>>, %arg13: memref<64x32xbf16, #tpu.memory_space<vmem>>, %arg14: memref<1x32xf32, #tpu.memory_space<vmem>>, %arg15: memref<1x8x32xf32, #tpu.memory_space<vmem>>, %arg16: memref<1x2x8x16xf32, #tpu.memory_space<vmem>>, %arg17: memref<8x16xf32, #tpu.memory_space<vmem>>, %arg18: memref<8x2xf32, #tpu.memory_space<vmem>>, %arg19: memref<8x2xf32, #tpu.memory_space<vmem>>, %arg20: memref<8x16xf32, #tpu.memory_space<vmem>>) attributes {dimension_semantics = [#tpu.dimension_semantics<parallel>, #tpu.dimension_semantics<arbitrary>], iteration_bounds = array<i64: 2, 1>, scalar_prefetch = 0 : i64, scratch_operands = 4 : i64, tpu.core_type = #tpu.core_type<tc>, window_params = [{transform_indices = @transform_0, window_bounds = array<i64: 1, 8, 32>}, {transform_indices = @transform_1, window_bounds = array<i64: 1, 16, 32>}, {transform_indices = @transform_2, window_bounds = array<i64: 1, 16, 32>}, {pipeline_mode = #tpu.pipeline_mode<synchronous>, transform_indices = @transform_3, window_bounds = array<i64: 32, 48>}, {pipeline_mode = #tpu.pipeline_mode<synchronous>, transform_indices = @transform_4, window_bounds = array<i64: 1, 48>}, {pipeline_mode = #tpu.pipeline_mode<synchronous>, transform_indices = @transform_5, window_bounds = array<i64: 16, 32>}, {pipeline_mode = #tpu.pipeline_mode<synchronous>, transform_indices = @transform_6, window_bounds = array<i64: 1, 32>}, {pipeline_mode = #tpu.pipeline_mode<synchronous>, transform_indices = @transform_7, window_bounds = array<i64: 2, 32>}, {pipeline_mode = #tpu.pipeline_mode<synchronous>, transform_indices = @transform_8, window_bounds = array<i64: 2, 32>}, {pipeline_mode = #tpu.pipeline_mode<synchronous>, transform_indices = @transform_9, window_bounds = array<i64: 32, 64>}, {pipeline_mode = #tpu.pipeline_mode<synchronous>, transform_indices = @transform_10, window_bounds = array<i64: 1, 64>}, {pipeline_mode = #tpu.pipeline_mode<synchronous>, transform_indices = @transform_11, window_bounds = array<i64: 64, 32>}, {pipeline_mode = #tpu.pipeline_mode<synchronous>, transform_indices = @transform_12, window_bounds = array<i64: 1, 32>}, {transform_indices = @transform_13, window_bounds = array<i64: 1, 8, 32>}, {transform_indices = @transform_14, window_bounds = array<i64: 1, 2, 8, 16>}]} {
    %c0 = arith.constant 0 : index
    %c0_0 = arith.constant 0 : index
    %0 = vector.load %arg5[%c0, %c0_0] : memref<32x48xbf16, #tpu.memory_space<vmem>>, vector<32x48xbf16>
    %c0_1 = arith.constant 0 : index
    %c0_2 = arith.constant 0 : index
    %1 = vector.load %arg6[%c0_1, %c0_2] : memref<1x48xf32, #tpu.memory_space<vmem>>, vector<1x48xf32>
    %c0_i32 = arith.constant 0 : i32
    %2 = arith.cmpi eq, %arg1, %c0_i32 : i32
    %3 = arith.extui %2 : i1 to i32
    %c0_i32_3 = arith.constant 0 : i32
    %4 = arith.cmpi ne, %3, %c0_i32_3 : i32
    scf.if %4 {
      %c0_57 = arith.constant 0 : index
      %c0_58 = arith.constant 0 : index
      %c0_59 = arith.constant 0 : index
      %87 = vector.load %arg2[%c0_57, %c0_58, %c0_59] : memref<1x8x32xf32, #tpu.memory_space<vmem>>, vector<1x8x32xf32>
      %88 = vector.shape_cast %87 : vector<1x8x32xf32> to vector<8x32xf32>
      %89 = arith.truncf %88 : vector<8x32xf32> to vector<8x32xbf16>
      %90 = vector.extract_strided_slice %0 {offsets = [0, 0], sizes = [32, 16], strides = [1, 1]} : vector<32x48xbf16> to vector<32x16xbf16>
      %cst_60 = arith.constant dense<0.000000e+00> : vector<8x16xf32>
      %91 = tpu.matmul %89, %90, %cst_60 {dimension_numbers = #tpu.dot_dimension_numbers<[1], [0], [0], [1], [0, 0, 1, 1], [], []>} : vector<8x32xbf16>, vector<32x16xbf16>, vector<8x16xf32> -> vector<8x16xf32>
      %92 = vector.extract_strided_slice %1 {offsets = [0, 0], sizes = [1, 16], strides = [1, 1]} : vector<1x48xf32> to vector<1x16xf32>
      %93 = vector.broadcast %92 : vector<1x16xf32> to vector<8x16xf32>
      %94 = arith.addf %91, %93 : vector<8x16xf32>
      %c0_61 = arith.constant 0 : index
      %c0_62 = arith.constant 0 : index
      %95 = vector.load %arg17[%c0_61, %c0_62] : memref<8x16xf32, #tpu.memory_space<vmem>>, vector<8x16xf32>
      tpu.vector_store %arg17[%c0_61, %c0_62], %94 {strides = array<i32>} : memref<8x16xf32, #tpu.memory_space<vmem>>, vector<8x16xf32>,
      %cst_63 = arith.constant 0xFF800000 : f32
      %96 = vector.broadcast %cst_63 : f32 to vector<8x2xf32>
      %c0_64 = arith.constant 0 : index
      %c0_65 = arith.constant 0 : index
      %97 = vector.load %arg18[%c0_64, %c0_65] : memref<8x2xf32, #tpu.memory_space<vmem>>, vector<8x2xf32>
      tpu.vector_store %arg18[%c0_64, %c0_65], %96 {strides = array<i32>} : memref<8x2xf32, #tpu.memory_space<vmem>>, vector<8x2xf32>,
      %cst_66 = arith.constant 0.000000e+00 : f32
      %98 = vector.broadcast %cst_66 : f32 to vector<8x2xf32>
      %c0_67 = arith.constant 0 : index
      %c0_68 = arith.constant 0 : index
      %99 = vector.load %arg19[%c0_67, %c0_68] : memref<8x2xf32, #tpu.memory_space<vmem>>, vector<8x2xf32>
      tpu.vector_store %arg19[%c0_67, %c0_68], %98 {strides = array<i32>} : memref<8x2xf32, #tpu.memory_space<vmem>>, vector<8x2xf32>,
      %cst_69 = arith.constant 0.000000e+00 : f32
      %100 = vector.broadcast %cst_69 : f32 to vector<8x16xf32>
      %c0_70 = arith.constant 0 : index
      %c0_71 = arith.constant 0 : index
      %101 = vector.load %arg20[%c0_70, %c0_71] : memref<8x16xf32, #tpu.memory_space<vmem>>, vector<8x16xf32>
      tpu.vector_store %arg20[%c0_70, %c0_71], %100 {strides = array<i32>} : memref<8x16xf32, #tpu.memory_space<vmem>>, vector<8x16xf32>,
    } else {
    }
    %c0_4 = arith.constant 0 : index
    %c0_5 = arith.constant 0 : index
    %c0_6 = arith.constant 0 : index
    %5 = vector.load %arg3[%c0_4, %c0_5, %c0_6] : memref<1x16x32xf32, #tpu.memory_space<vmem>>, vector<1x16x32xf32>
    %6 = vector.shape_cast %5 : vector<1x16x32xf32> to vector<16x32xf32>
    %c0_7 = arith.constant 0 : index
    %c0_8 = arith.constant 0 : index
    %c0_9 = arith.constant 0 : index
    %7 = vector.load %arg4[%c0_7, %c0_8, %c0_9] : memref<1x16x32xf32, #tpu.memory_space<vmem>>, vector<1x16x32xf32>
    %8 = vector.shape_cast %7 : vector<1x16x32xf32> to vector<16x32xf32>
    %9 = arith.addf %6, %8 : vector<16x32xf32>
    %10 = arith.truncf %9 : vector<16x32xf32> to vector<16x32xbf16>
    %11 = vector.extract_strided_slice %0 {offsets = [0, 16], sizes = [32, 16], strides = [1, 1]} : vector<32x48xbf16> to vector<32x16xbf16>
    %cst = arith.constant dense<0.000000e+00> : vector<16x16xf32>
    %12 = tpu.matmul %10, %11, %cst {dimension_numbers = #tpu.dot_dimension_numbers<[1], [0], [0], [1], [0, 0, 1, 1], [], []>} : vector<16x32xbf16>, vector<32x16xbf16>, vector<16x16xf32> -> vector<16x16xf32>
    %13 = vector.extract_strided_slice %1 {offsets = [0, 16], sizes = [1, 16], strides = [1, 1]} : vector<1x48xf32> to vector<1x16xf32>
    %14 = vector.broadcast %13 : vector<1x16xf32> to vector<16x16xf32>
    %15 = arith.addf %12, %14 : vector<16x16xf32>
    %16 = arith.truncf %6 : vector<16x32xf32> to vector<16x32xbf16>
    %17 = vector.extract_strided_slice %0 {offsets = [0, 32], sizes = [32, 16], strides = [1, 1]} : vector<32x48xbf16> to vector<32x16xbf16>
    %cst_10 = arith.constant dense<0.000000e+00> : vector<16x16xf32>
    %18 = tpu.matmul %16, %17, %cst_10 {dimension_numbers = #tpu.dot_dimension_numbers<[1], [0], [0], [1], [0, 0, 1, 1], [], []>} : vector<16x32xbf16>, vector<32x16xbf16>, vector<16x16xf32> -> vector<16x16xf32>
    %19 = vector.extract_strided_slice %1 {offsets = [0, 32], sizes = [1, 16], strides = [1, 1]} : vector<1x48xf32> to vector<1x16xf32>
    %20 = vector.broadcast %19 : vector<1x16xf32> to vector<16x16xf32>
    %21 = arith.addf %18, %20 : vector<16x16xf32>
    %c0_11 = arith.constant 0 : index
    %c0_12 = arith.constant 0 : index
    %22 = vector.load %arg17[%c0_11, %c0_12] : memref<8x16xf32, #tpu.memory_space<vmem>>, vector<8x8xf32>
    %23 = vector.extract_strided_slice %15 {offsets = [0, 0], sizes = [16, 8], strides = [1, 1]} : vector<16x16xf32> to vector<16x8xf32>
    %24 = vector.extract_strided_slice %21 {offsets = [0, 0], sizes = [16, 8], strides = [1, 1]} : vector<16x16xf32> to vector<16x8xf32>
    %cst_13 = arith.constant dense<0.000000e+00> : vector<8x16xf32>
    %25 = tpu.matmul %22, %23, %cst_13 {dimension_numbers = #tpu.dot_dimension_numbers<[1], [1], [0], [0], [0, 0, 1, 0], [], []>} : vector<8x8xf32>, vector<16x8xf32>, vector<8x16xf32> -> vector<8x16xf32>
    %cst_14 = arith.constant 0.353553385 : f32
    %26 = vector.broadcast %cst_14 : f32 to vector<8x16xf32>
    %27 = arith.mulf %25, %26 : vector<8x16xf32>
    %c0_15 = arith.constant 0 : index
    %c0_16 = arith.constant 0 : index
    %c0_17 = arith.constant 0 : index
    %c0_18 = arith.constant 0 : index
    %28 = vector.load %arg16[%c0_15, %c0_16, %c0_17, %c0_18] : memref<1x2x8x16xf32, #tpu.memory_space<vmem>>, vector<1x1x8x16xf32>
    %29 = vector.shape_cast %28 : vector<1x1x8x16xf32> to vector<8x16xf32>
    %30 = vector.shape_cast %27 : vector<8x16xf32> to vector<1x1x8x16xf32>
    tpu.vector_store %arg16[%c0_15, %c0_16, %c0_17, %c0_18], %30 {strides = array<i32>} : memref<1x2x8x16xf32, #tpu.memory_space<vmem>>, vector<1x1x8x16xf32>,
    %c0_19 = arith.constant 0 : index
    %c0_20 = arith.constant 0 : index
    %31 = vector.load %arg18[%c0_19, %c0_20] : memref<8x2xf32, #tpu.memory_space<vmem>>, vector<8x1xf32>
    %cst_21 = arith.constant dense<0xFF800000> : vector<8xf32>
    %32 = vector.multi_reduction <maximumf>, %27, %cst_21 [1] : vector<8x16xf32> to vector<8xf32>
    %33 = vector.shape_cast %32 : vector<8xf32> to vector<8x1xf32>
    %34 = arith.maximumf %31, %33 : vector<8x1xf32>
    %35 = arith.subf %31, %34 : vector<8x1xf32>
    %36 = math.exp %35 : vector<8x1xf32>
    %37 = vector.broadcast %34 : vector<8x1xf32> to vector<8x16xf32>
    %38 = arith.subf %27, %37 : vector<8x16xf32>
    %39 = math.exp %38 : vector<8x16xf32>
    %c0_22 = arith.constant 0 : index
    %c0_23 = arith.constant 0 : index
    %40 = vector.load %arg19[%c0_22, %c0_23] : memref<8x2xf32, #tpu.memory_space<vmem>>, vector<8x1xf32>
    %41 = arith.mulf %36, %40 : vector<8x1xf32>
    %cst_24 = arith.constant dense<0.000000e+00> : vector<8xf32>
    %42 = vector.multi_reduction <add>, %39, %cst_24 [1] : vector<8x16xf32> to vector<8xf32>
    %43 = vector.shape_cast %42 : vector<8xf32> to vector<8x1xf32>
    %44 = arith.addf %41, %43 : vector<8x1xf32>
    %c0_25 = arith.constant 0 : index
    %c0_26 = arith.constant 0 : index
    %45 = vector.load %arg19[%c0_25, %c0_26] : memref<8x2xf32, #tpu.memory_space<vmem>>, vector<8x1xf32>
    tpu.vector_store %arg19[%c0_25, %c0_26], %44 {strides = array<i32>} : memref<8x2xf32, #tpu.memory_space<vmem>>, vector<8x1xf32>,
    %c0_27 = arith.constant 0 : index
    %c0_28 = arith.constant 0 : index
    %46 = vector.load %arg20[%c0_27, %c0_28] : memref<8x16xf32, #tpu.memory_space<vmem>>, vector<8x8xf32>
    %47 = vector.broadcast %36 : vector<8x1xf32> to vector<8x8xf32>
    %48 = arith.mulf %47, %46 : vector<8x8xf32>
    %cst_29 = arith.constant dense<0.000000e+00> : vector<8x8xf32>
    %49 = tpu.matmul %39, %24, %cst_29 {dimension_numbers = #tpu.dot_dimension_numbers<[1], [0], [0], [1], [0, 0, 1, 1], [], []>} : vector<8x16xf32>, vector<16x8xf32>, vector<8x8xf32> -> vector<8x8xf32>
    %50 = arith.addf %48, %49 : vector<8x8xf32>
    %c0_30 = arith.constant 0 : index
    %c0_31 = arith.constant 0 : index
    %51 = vector.load %arg20[%c0_30, %c0_31] : memref<8x16xf32, #tpu.memory_space<vmem>>, vector<8x8xf32>
    tpu.vector_store %arg20[%c0_30, %c0_31], %50 {strides = array<i32>} : memref<8x16xf32, #tpu.memory_space<vmem>>, vector<8x8xf32>,
    %c0_32 = arith.constant 0 : index
    %c0_33 = arith.constant 0 : index
    %52 = vector.load %arg18[%c0_32, %c0_33] : memref<8x2xf32, #tpu.memory_space<vmem>>, vector<8x1xf32>
    tpu.vector_store %arg18[%c0_32, %c0_33], %34 {strides = array<i32>} : memref<8x2xf32, #tpu.memory_space<vmem>>, vector<8x1xf32>,
    %c0_34 = arith.constant 0 : index
    %c8 = arith.constant 8 : index
    %53 = vector.load %arg17[%c0_34, %c8] : memref<8x16xf32, #tpu.memory_space<vmem>>, vector<8x8xf32>
    %54 = vector.extract_strided_slice %15 {offsets = [0, 8], sizes = [16, 8], strides = [1, 1]} : vector<16x16xf32> to vector<16x8xf32>
    %55 = vector.extract_strided_slice %21 {offsets = [0, 8], sizes = [16, 8], strides = [1, 1]} : vector<16x16xf32> to vector<16x8xf32>
    %cst_35 = arith.constant dense<0.000000e+00> : vector<8x16xf32>
    %56 = tpu.matmul %53, %54, %cst_35 {dimension_numbers = #tpu.dot_dimension_numbers<[1], [1], [0], [0], [0, 0, 1, 0], [], []>} : vector<8x8xf32>, vector<16x8xf32>, vector<8x16xf32> -> vector<8x16xf32>
    %cst_36 = arith.constant 0.353553385 : f32
    %57 = vector.broadcast %cst_36 : f32 to vector<8x16xf32>
    %58 = arith.mulf %56, %57 : vector<8x16xf32>
    %c0_37 = arith.constant 0 : index
    %c1 = arith.constant 1 : index
    %c0_38 = arith.constant 0 : index
    %c0_39 = arith.constant 0 : index
    %59 = vector.load %arg16[%c0_37, %c1, %c0_38, %c0_39] : memref<1x2x8x16xf32, #tpu.memory_space<vmem>>, vector<1x1x8x16xf32>
    %60 = vector.shape_cast %59 : vector<1x1x8x16xf32> to vector<8x16xf32>
    %61 = vector.shape_cast %58 : vector<8x16xf32> to vector<1x1x8x16xf32>
    tpu.vector_store %arg16[%c0_37, %c1, %c0_38, %c0_39], %61 {strides = array<i32>} : memref<1x2x8x16xf32, #tpu.memory_space<vmem>>, vector<1x1x8x16xf32>,
    %c0_40 = arith.constant 0 : index
    %c1_41 = arith.constant 1 : index
    %62 = vector.load %arg18[%c0_40, %c1_41] : memref<8x2xf32, #tpu.memory_space<vmem>>, vector<8x1xf32>
    %cst_42 = arith.constant dense<0xFF800000> : vector<8xf32>
    %63 = vector.multi_reduction <maximumf>, %58, %cst_42 [1] : vector<8x16xf32> to vector<8xf32>
    %64 = vector.shape_cast %63 : vector<8xf32> to vector<8x1xf32>
    %65 = arith.maximumf %62, %64 : vector<8x1xf32>
    %66 = arith.subf %62, %65 : vector<8x1xf32>
    %67 = math.exp %66 : vector<8x1xf32>
    %68 = vector.broadcast %65 : vector<8x1xf32> to vector<8x16xf32>
    %69 = arith.subf %58, %68 : vector<8x16xf32>
    %70 = math.exp %69 : vector<8x16xf32>
    %c0_43 = arith.constant 0 : index
    %c1_44 = arith.constant 1 : index
    %71 = vector.load %arg19[%c0_43, %c1_44] : memref<8x2xf32, #tpu.memory_space<vmem>>, vector<8x1xf32>
    %72 = arith.mulf %67, %71 : vector<8x1xf32>
    %cst_45 = arith.constant dense<0.000000e+00> : vector<8xf32>
    %73 = vector.multi_reduction <add>, %70, %cst_45 [1] : vector<8x16xf32> to vector<8xf32>
    %74 = vector.shape_cast %73 : vector<8xf32> to vector<8x1xf32>
    %75 = arith.addf %72, %74 : vector<8x1xf32>
    %c0_46 = arith.constant 0 : index
    %c1_47 = arith.constant 1 : index
    %76 = vector.load %arg19[%c0_46, %c1_47] : memref<8x2xf32, #tpu.memory_space<vmem>>, vector<8x1xf32>
    tpu.vector_store %arg19[%c0_46, %c1_47], %75 {strides = array<i32>} : memref<8x2xf32, #tpu.memory_space<vmem>>, vector<8x1xf32>,
    %c0_48 = arith.constant 0 : index
    %c8_49 = arith.constant 8 : index
    %77 = vector.load %arg20[%c0_48, %c8_49] : memref<8x16xf32, #tpu.memory_space<vmem>>, vector<8x8xf32>
    %78 = vector.broadcast %67 : vector<8x1xf32> to vector<8x8xf32>
    %79 = arith.mulf %78, %77 : vector<8x8xf32>
    %cst_50 = arith.constant dense<0.000000e+00> : vector<8x8xf32>
    %80 = tpu.matmul %70, %55, %cst_50 {dimension_numbers = #tpu.dot_dimension_numbers<[1], [0], [0], [1], [0, 0, 1, 1], [], []>} : vector<8x16xf32>, vector<16x8xf32>, vector<8x8xf32> -> vector<8x8xf32>
    %81 = arith.addf %79, %80 : vector<8x8xf32>
    %c0_51 = arith.constant 0 : index
    %c8_52 = arith.constant 8 : index
    %82 = vector.load %arg20[%c0_51, %c8_52] : memref<8x16xf32, #tpu.memory_space<vmem>>, vector<8x8xf32>
    tpu.vector_store %arg20[%c0_51, %c8_52], %81 {strides = array<i32>} : memref<8x16xf32, #tpu.memory_space<vmem>>, vector<8x8xf32>,
    %c0_53 = arith.constant 0 : index
    %c1_54 = arith.constant 1 : index
    %83 = vector.load %arg18[%c0_53, %c1_54] : memref<8x2xf32, #tpu.memory_space<vmem>>, vector<8x1xf32>
    tpu.vector_store %arg18[%c0_53, %c1_54], %65 {strides = array<i32>} : memref<8x2xf32, #tpu.memory_space<vmem>>, vector<8x1xf32>,
    %c0_i32_55 = arith.constant 0 : i32
    %84 = arith.cmpi eq, %arg1, %c0_i32_55 : i32
    %85 = arith.extui %84 : i1 to i32
    %c0_i32_56 = arith.constant 0 : i32
    %86 = arith.cmpi ne, %85, %c0_i32_56 : i32
    scf.if %86 {
      %c0_57 = arith.constant 0 : index
      %c0_58 = arith.constant 0 : index
      %87 = vector.load %arg19[%c0_57, %c0_58] : memref<8x2xf32, #tpu.memory_space<vmem>>, vector<8x2xf32>
      %88 = tpu.reciprocal %87 {approx = true} : vector<8x2xf32> -> vector<8x2xf32>
      %c0_59 = arith.constant 0 : index
      %c0_60 = arith.constant 0 : index
      %89 = vector.load %arg20[%c0_59, %c0_60] : memref<8x16xf32, #tpu.memory_space<vmem>>, vector<8x8xf32>
      %90 = vector.extract_strided_slice %88 {offsets = [0, 0], sizes = [8, 1], strides = [1, 1]} : vector<8x2xf32> to vector<8x1xf32>
      %91 = vector.broadcast %90 : vector<8x1xf32> to vector<8x8xf32>
      %92 = arith.mulf %89, %91 : vector<8x8xf32>
      %c0_61 = arith.constant 0 : index
      %c0_62 = arith.constant 0 : index
      %93 = vector.load %arg20[%c0_61, %c0_62] : memref<8x16xf32, #tpu.memory_space<vmem>>, vector<8x8xf32>
      tpu.vector_store %arg20[%c0_61, %c0_62], %92 {strides = array<i32>} : memref<8x16xf32, #tpu.memory_space<vmem>>, vector<8x8xf32>,
      %c0_63 = arith.constant 0 : index
      %c8_64 = arith.constant 8 : index
      %94 = vector.load %arg20[%c0_63, %c8_64] : memref<8x16xf32, #tpu.memory_space<vmem>>, vector<8x8xf32>
      %95 = vector.extract_strided_slice %88 {offsets = [0, 1], sizes = [8, 1], strides = [1, 1]} : vector<8x2xf32> to vector<8x1xf32>
      %96 = vector.broadcast %95 : vector<8x1xf32> to vector<8x8xf32>
      %97 = arith.mulf %94, %96 : vector<8x8xf32>
      %c0_65 = arith.constant 0 : index
      %c8_66 = arith.constant 8 : index
      %98 = vector.load %arg20[%c0_65, %c8_66] : memref<8x16xf32, #tpu.memory_space<vmem>>, vector<8x8xf32>
      tpu.vector_store %arg20[%c0_65, %c8_66], %97 {strides = array<i32>} : memref<8x16xf32, #tpu.memory_space<vmem>>, vector<8x8xf32>,
      %c0_67 = arith.constant 0 : index
      %c0_68 = arith.constant 0 : index
      %99 = vector.load %arg20[%c0_67, %c0_68] : memref<8x16xf32, #tpu.memory_space<vmem>>, vector<8x16xf32>
      %100 = arith.truncf %99 : vector<8x16xf32> to vector<8x16xbf16>
      %c0_69 = arith.constant 0 : index
      %c0_70 = arith.constant 0 : index
      %101 = vector.load %arg7[%c0_69, %c0_70] : memref<16x32xbf16, #tpu.memory_space<vmem>>, vector<16x32xbf16>
      %cst_71 = arith.constant dense<0.000000e+00> : vector<8x32xf32>
      %102 = tpu.matmul %100, %101, %cst_71 {dimension_numbers = #tpu.dot_dimension_numbers<[1], [0], [0], [1], [0, 0, 1, 1], [], []>} : vector<8x16xbf16>, vector<16x32xbf16>, vector<8x32xf32> -> vector<8x32xf32>
      %c0_72 = arith.constant 0 : index
      %c0_73 = arith.constant 0 : index
      %103 = vector.load %arg8[%c0_72, %c0_73] : memref<1x32xf32, #tpu.memory_space<vmem>>, vector<1x32xf32>
      %104 = vector.broadcast %103 : vector<1x32xf32> to vector<8x32xf32>
      %105 = arith.addf %102, %104 : vector<8x32xf32>
      %c0_74 = arith.constant 0 : index
      %c0_75 = arith.constant 0 : index
      %106 = vector.load %arg9[%c0_74, %c0_75] : memref<2x32xf32, #tpu.memory_space<vmem>>, vector<2x32xf32>
      %c0_76 = arith.constant 0 : index
      %c0_77 = arith.constant 0 : index
      %107 = vector.load %arg10[%c0_76, %c0_77] : memref<2x32xf32, #tpu.memory_space<vmem>>, vector<2x32xf32>
      %c0_78 = arith.constant 0 : index
      %c0_79 = arith.constant 0 : index
      %c0_80 = arith.constant 0 : index
      %108 = vector.load %arg2[%c0_78, %c0_79, %c0_80] : memref<1x8x32xf32, #tpu.memory_space<vmem>>, vector<1x8x32xf32>
      %109 = vector.shape_cast %108 : vector<1x8x32xf32> to vector<8x32xf32>
      %110 = arith.addf %109, %105 : vector<8x32xf32>
      %111 = vector.extract_strided_slice %106 {offsets = [0, 0], sizes = [1, 32], strides = [1, 1]} : vector<2x32xf32> to vector<1x32xf32>
      %112 = vector.extract_strided_slice %107 {offsets = [0, 0], sizes = [1, 32], strides = [1, 1]} : vector<2x32xf32> to vector<1x32xf32>
      %cst_81 = arith.constant dense<0.000000e+00> : vector<8xf32>
      %113 = vector.multi_reduction <add>, %110, %cst_81 [1] : vector<8x32xf32> to vector<8xf32>
      %114 = vector.shape_cast %113 : vector<8xf32> to vector<8x1xf32>
      %cst_82 = arith.constant 3.200000e+01 : f32
      %115 = vector.broadcast %cst_82 : f32 to vector<8x1xf32>
      %116 = arith.divf %114, %115 : vector<8x1xf32>
      %117 = vector.broadcast %116 : vector<8x1xf32> to vector<8x32xf32>
      %118 = arith.subf %110, %117 : vector<8x32xf32>
      %119 = arith.mulf %118, %118 : vector<8x32xf32>
      %cst_83 = arith.constant dense<0.000000e+00> : vector<8xf32>
      %120 = vector.multi_reduction <add>, %119, %cst_83 [1] : vector<8x32xf32> to vector<8xf32>
      %121 = vector.shape_cast %120 : vector<8xf32> to vector<8x1xf32>
      %cst_84 = arith.constant 3.200000e+01 : f32
      %122 = vector.broadcast %cst_84 : f32 to vector<8x1xf32>
      %123 = arith.divf %121, %122 : vector<8x1xf32>
      %cst_85 = arith.constant 9.99999974E-6 : f32
      %124 = vector.broadcast %cst_85 : f32 to vector<8x1xf32>
      %125 = arith.addf %123, %124 : vector<8x1xf32>
      %126 = math.rsqrt %125 : vector<8x1xf32>
      %127 = vector.broadcast %126 : vector<8x1xf32> to vector<8x32xf32>
      %128 = arith.mulf %118, %127 : vector<8x32xf32>
      %129 = vector.broadcast %111 : vector<1x32xf32> to vector<8x32xf32>
      %130 = arith.mulf %128, %129 : vector<8x32xf32>
      %131 = vector.broadcast %112 : vector<1x32xf32> to vector<8x32xf32>
      %132 = arith.addf %130, %131 : vector<8x32xf32>
      %133 = arith.truncf %132 : vector<8x32xf32> to vector<8x32xbf16>
      %c0_86 = arith.constant 0 : index
      %c0_87 = arith.constant 0 : index
      %134 = vector.load %arg11[%c0_86, %c0_87] : memref<32x64xbf16, #tpu.memory_space<vmem>>, vector<32x64xbf16>
      %cst_88 = arith.constant dense<0.000000e+00> : vector<8x64xf32>
      %135 = tpu.matmul %133, %134, %cst_88 {dimension_numbers = #tpu.dot_dimension_numbers<[1], [0], [0], [1], [0, 0, 1, 1], [], []>} : vector<8x32xbf16>, vector<32x64xbf16>, vector<8x64xf32> -> vector<8x64xf32>
      %c0_89 = arith.constant 0 : index
      %c0_90 = arith.constant 0 : index
      %136 = vector.load %arg12[%c0_89, %c0_90] : memref<1x64xf32, #tpu.memory_space<vmem>>, vector<1x64xf32>
      %137 = vector.broadcast %136 : vector<1x64xf32> to vector<8x64xf32>
      %138 = arith.addf %135, %137 : vector<8x64xf32>
      %cst_91 = arith.constant 0.000000e+00 : f32
      %139 = vector.broadcast %cst_91 : f32 to vector<8x64xf32>
      %140 = arith.maximumf %138, %139 : vector<8x64xf32>
      %141 = arith.truncf %140 : vector<8x64xf32> to vector<8x64xbf16>
      %c0_92 = arith.constant 0 : index
      %c0_93 = arith.constant 0 : index
      %142 = vector.load %arg13[%c0_92, %c0_93] : memref<64x32xbf16, #tpu.memory_space<vmem>>, vector<64x32xbf16>
      %cst_94 = arith.constant dense<0.000000e+00> : vector<8x32xf32>
      %143 = tpu.matmul %141, %142, %cst_94 {dimension_numbers = #tpu.dot_dimension_numbers<[1], [0], [0], [1], [0, 0, 1, 1], [], []>} : vector<8x64xbf16>, vector<64x32xbf16>, vector<8x32xf32> -> vector<8x32xf32>
      %c0_95 = arith.constant 0 : index
      %c0_96 = arith.constant 0 : index
      %144 = vector.load %arg14[%c0_95, %c0_96] : memref<1x32xf32, #tpu.memory_space<vmem>>, vector<1x32xf32>
      %145 = vector.broadcast %144 : vector<1x32xf32> to vector<8x32xf32>
      %146 = arith.addf %143, %145 : vector<8x32xf32>
      %147 = arith.addf %132, %146 : vector<8x32xf32>
      %148 = vector.extract_strided_slice %106 {offsets = [1, 0], sizes = [1, 32], strides = [1, 1]} : vector<2x32xf32> to vector<1x32xf32>
      %149 = vector.extract_strided_slice %107 {offsets = [1, 0], sizes = [1, 32], strides = [1, 1]} : vector<2x32xf32> to vector<1x32xf32>
      %cst_97 = arith.constant dense<0.000000e+00> : vector<8xf32>
      %150 = vector.multi_reduction <add>, %147, %cst_97 [1] : vector<8x32xf32> to vector<8xf32>
      %151 = vector.shape_cast %150 : vector<8xf32> to vector<8x1xf32>
      %cst_98 = arith.constant 3.200000e+01 : f32
      %152 = vector.broadcast %cst_98 : f32 to vector<8x1xf32>
      %153 = arith.divf %151, %152 : vector<8x1xf32>
      %154 = vector.broadcast %153 : vector<8x1xf32> to vector<8x32xf32>
      %155 = arith.subf %147, %154 : vector<8x32xf32>
      %156 = arith.mulf %155, %155 : vector<8x32xf32>
      %cst_99 = arith.constant dense<0.000000e+00> : vector<8xf32>
      %157 = vector.multi_reduction <add>, %156, %cst_99 [1] : vector<8x32xf32> to vector<8xf32>
      %158 = vector.shape_cast %157 : vector<8xf32> to vector<8x1xf32>
      %cst_100 = arith.constant 3.200000e+01 : f32
      %159 = vector.broadcast %cst_100 : f32 to vector<8x1xf32>
      %160 = arith.divf %158, %159 : vector<8x1xf32>
      %cst_101 = arith.constant 9.99999974E-6 : f32
      %161 = vector.broadcast %cst_101 : f32 to vector<8x1xf32>
      %162 = arith.addf %160, %161 : vector<8x1xf32>
      %163 = math.rsqrt %162 : vector<8x1xf32>
      %164 = vector.broadcast %163 : vector<8x1xf32> to vector<8x32xf32>
      %165 = arith.mulf %155, %164 : vector<8x32xf32>
      %166 = vector.broadcast %148 : vector<1x32xf32> to vector<8x32xf32>
      %167 = arith.mulf %165, %166 : vector<8x32xf32>
      %168 = vector.broadcast %149 : vector<1x32xf32> to vector<8x32xf32>
      %169 = arith.addf %167, %168 : vector<8x32xf32>
      %c0_102 = arith.constant 0 : index
      %c0_103 = arith.constant 0 : index
      %c0_104 = arith.constant 0 : index
      %170 = vector.load %arg15[%c0_102, %c0_103, %c0_104] : memref<1x8x32xf32, #tpu.memory_space<vmem>>, vector<1x8x32xf32>
      %171 = vector.shape_cast %170 : vector<1x8x32xf32> to vector<8x32xf32>
      %172 = vector.shape_cast %169 : vector<8x32xf32> to vector<1x8x32xf32>
      tpu.vector_store %arg15[%c0_102, %c0_103, %c0_104], %172 {strides = array<i32>} : memref<1x8x32xf32, #tpu.memory_space<vmem>>, vector<1x8x32xf32>,
    } else {
    }
    return
  }
  func.func @transform_0(%arg0: i32, %arg1: i32) -> (i32, i32, i32) {
    %c0_i32 = arith.constant 0 : i32
    %c0_i32_0 = arith.constant 0 : i32
    %c0_i32_1 = arith.constant 0 : i32
    return %arg0, %c0_i32, %c0_i32_0 : i32, i32, i32
  }
  func.func @transform_1(%arg0: i32, %arg1: i32) -> (i32, i32, i32) {
    %c0_i32 = arith.constant 0 : i32
    %c0_i32_0 = arith.constant 0 : i32
    return %arg0, %arg1, %c0_i32 : i32, i32, i32
  }
  func.func @transform_2(%arg0: i32, %arg1: i32) -> (i32, i32, i32) {
    %c0_i32 = arith.constant 0 : i32
    %c0_i32_0 = arith.constant 0 : i32
    return %arg0, %arg1, %c0_i32 : i32, i32, i32
  }
  func.func @transform_3(%arg0: i32, %arg1: i32) -> (i32, i32) {
    %c0_i32 = arith.constant 0 : i32
    %c0_i32_0 = arith.constant 0 : i32
    %c0_i32_1 = arith.constant 0 : i32
    return %c0_i32, %c0_i32_0 : i32, i32
  }
  func.func @transform_4(%arg0: i32, %arg1: i32) -> (i32, i32) {
    %c0_i32 = arith.constant 0 : i32
    %c0_i32_0 = arith.constant 0 : i32
    %c0_i32_1 = arith.constant 0 : i32
    return %c0_i32, %c0_i32_0 : i32, i32
  }
  func.func @transform_5(%arg0: i32, %arg1: i32) -> (i32, i32) {
    %c0_i32 = arith.constant 0 : i32
    %c0_i32_0 = arith.constant 0 : i32
    %c0_i32_1 = arith.constant 0 : i32
    return %c0_i32, %c0_i32_0 : i32, i32
  }
  func.func @transform_6(%arg0: i32, %arg1: i32) -> (i32, i32) {
    %c0_i32 = arith.constant 0 : i32
    %c0_i32_0 = arith.constant 0 : i32
    %c0_i32_1 = arith.constant 0 : i32
    return %c0_i32, %c0_i32_0 : i32, i32
  }
  func.func @transform_7(%arg0: i32, %arg1: i32) -> (i32, i32) {
    %c0_i32 = arith.constant 0 : i32
    %c0_i32_0 = arith.constant 0 : i32
    %c0_i32_1 = arith.constant 0 : i32
    return %c0_i32, %c0_i32_0 : i32, i32
  }
  func.func @transform_8(%arg0: i32, %arg1: i32) -> (i32, i32) {
    %c0_i32 = arith.constant 0 : i32
    %c0_i32_0 = arith.constant 0 : i32
    %c0_i32_1 = arith.constant 0 : i32
    return %c0_i32, %c0_i32_0 : i32, i32
  }
  func.func @transform_9(%arg0: i32, %arg1: i32) -> (i32, i32) {
    %c0_i32 = arith.constant 0 : i32
    %c0_i32_0 = arith.constant 0 : i32
    %c0_i32_1 = arith.constant 0 : i32
    return %c0_i32, %c0_i32_0 : i32, i32
  }
  func.func @transform_10(%arg0: i32, %arg1: i32) -> (i32, i32) {
    %c0_i32 = arith.constant 0 : i32
    %c0_i32_0 = arith.constant 0 : i32
    %c0_i32_1 = arith.constant 0 : i32
    return %c0_i32, %c0_i32_0 : i32, i32
  }
  func.func @transform_11(%arg0: i32, %arg1: i32) -> (i32, i32) {
    %c0_i32 = arith.constant 0 : i32
    %c0_i32_0 = arith.constant 0 : i32
    %c0_i32_1 = arith.constant 0 : i32
    return %c0_i32, %c0_i32_0 : i32, i32
  }
  func.func @transform_12(%arg0: i32, %arg1: i32) -> (i32, i32) {
    %c0_i32 = arith.constant 0 : i32
    %c0_i32_0 = arith.constant 0 : i32
    %c0_i32_1 = arith.constant 0 : i32
    return %c0_i32, %c0_i32_0 : i32, i32
  }
  func.func @transform_13(%arg0: i32, %arg1: i32) -> (i32, i32, i32) {
    %c0_i32 = arith.constant 0 : i32
    %c0_i32_0 = arith.constant 0 : i32
    %c0_i32_1 = arith.constant 0 : i32
    return %arg0, %c0_i32, %c0_i32_0 : i32, i32, i32
  }
  func.func @transform_14(%arg0: i32, %arg1: i32) -> (i32, i32, i32, i32) {
    %c0_i32 = arith.constant 0 : i32
    %c0_i32_0 = arith.constant 0 : i32
    %c0_i32_1 = arith.constant 0 : i32
    return %arg0, %c0_i32, %c0_i32_0, %arg1 : i32, i32, i32, i32
  }
}

</mosaic_0001>

<llo_original>
// kernel: tpu_custom_call.1
$region0: #{tpu_custom_call.1}
  #allocation0 [shape = 'u32[]', space=smem, size = 0x4, offset = 0x4, fixed_abs, tag = 'smem constant byte address 0x4 - core index']
  #allocation1 [shape = 'u32[144,128]{1,0:T(1,128)}', space=vmem, size = 0x12000, scoped, tag = 'internal scratch']
  #allocation2 [shape = 'f32[8,16]{1,0:T(8,128)}', space=vmem, size = 0x1000, scoped, tag = 'scratch operand']
  #allocation3 [shape = 'f32[8,2]{1,0:T(8,128)}', space=vmem, size = 0x1000, scoped, tag = 'scratch operand']
  #allocation4 [shape = 'f32[8,2]{1,0:T(8,128)}', space=vmem, size = 0x1000, scoped, tag = 'scratch operand']
  #allocation5 [shape = 'f32[8,16]{1,0:T(8,128)}', space=vmem, size = 0x1000, scoped, tag = 'scratch operand']
  %s0 = inlined_call_operand.hbm [shape: f32[2,8,32], index: 0, kind: input, shape index: {}]
  %s1 = inlined_call_operand.hbm [shape: f32[2,16,32], index: 1, kind: input, shape index: {}]
  %s2 = inlined_call_operand.hbm [shape: f32[2,16,32], index: 2, kind: input, shape index: {}]
  %s3 = inlined_call_operand.hbm [shape: bf16[32,48], index: 3, kind: input, shape index: {}]
  %s4 = inlined_call_operand.hbm [shape: f32[1,48], index: 4, kind: input, shape index: {}]
  %s5 = inlined_call_operand.hbm [shape: bf16[16,32], index: 5, kind: input, shape index: {}]
  %s6 = inlined_call_operand.hbm [shape: f32[1,32], index: 6, kind: input, shape index: {}]
  %s7 = inlined_call_operand.hbm [shape: f32[2,32], index: 7, kind: input, shape index: {}]
  %s8 = inlined_call_operand.hbm [shape: f32[2,32], index: 8, kind: input, shape index: {}]
  %s9 = inlined_call_operand.hbm [shape: bf16[32,64], index: 9, kind: input, shape index: {}]
  %s10 = inlined_call_operand.hbm [shape: f32[1,64], index: 10, kind: input, shape index: {}]
  %s11 = inlined_call_operand.hbm [shape: bf16[64,32], index: 11, kind: input, shape index: {}]
  %s12 = inlined_call_operand.hbm [shape: f32[1,32], index: 12, kind: input, shape index: {}]
  %s13 = inlined_call_operand.hbm [shape: f32[2,8,32], index: 13, kind: output, shape index: {0}]
  %s14 = inlined_call_operand.hbm [shape: f32[2,2,8,16], index: 14, kind: output, shape index: {1}]
  %15 = xla_tuple %s13, %s14
  %s16 = sld [smem:[#allocation0]]
  $region153: #{tpu_custom_call.1} parent=0
    _
  %s18 = ssub.s32 1, %s16
  %s19 = scalar_select 0, %s18, %s16
  $region1: #{tpu_custom_call.1} parent=0
    #allocation6 [shape = 'u8[8192]{0}', space=vmem, size = 0x2000, scoped, tag = 'input window, operand 0']
    #allocation7 [shape = 's32[2]{0}', space=sflag, size = 0x8, scoped, tag = 'scoped memory for tpu_custom_call.1']
    #allocation8 [shape = 's32[2]{0}', space=sflag, size = 0x8, scoped, tag = 'scoped memory for tpu_custom_call.1']
    #allocation9 [shape = 'u8[16384]{0}', space=vmem, size = 0x4000, scoped, tag = 'input window, operand 1']
    #allocation10 [shape = 's32[2]{0}', space=sflag, size = 0x8, scoped, tag = 'scoped memory for tpu_custom_call.1']
    #allocation11 [shape = 'u8[16384]{0}', space=vmem, size = 0x4000, scoped, tag = 'input window, operand 2']
    #allocation12 [shape = 'u8[8192]{0}', space=vmem, size = 0x2000, scoped, tag = 'input window, operand 3, single buffered']
    #allocation13 [shape = 's32[1]{0}', space=sflag, size = 0x4, scoped, tag = 'scoped memory for tpu_custom_call.1']
    #allocation14 [shape = 'u8[512]{0}', space=vmem, size = 0x400, scoped, tag = 'input window, operand 4, single buffered']
    #allocation15 [shape = 'u8[4096]{0}', space=vmem, size = 0x1000, scoped, tag = 'input window, operand 5, single buffered']
    #allocation16 [shape = 's32[1]{0}', space=sflag, size = 0x4, scoped, tag = 'scoped memory for tpu_custom_call.1']
    #allocation17 [shape = 'u8[512]{0}', space=vmem, size = 0x400, scoped, tag = 'input window, operand 6, single buffered']
    #allocation18 [shape = 'u8[1024]{0}', space=vmem, size = 0x400, scoped, tag = 'input window, operand 7, single buffered']
    #allocation19 [shape = 's32[1]{0}', space=sflag, size = 0x4, scoped, tag = 'scoped memory for tpu_custom_call.1']
    #allocation20 [shape = 'u8[1024]{0}', space=vmem, size = 0x400, scoped, tag = 'input window, operand 8, single buffered']
    #allocation21 [shape = 'u8[8192]{0}', space=vmem, size = 0x2000, scoped, tag = 'input window, operand 9, single buffered']
    #allocation22 [shape = 's32[1]{0}', space=sflag, size = 0x4, scoped, tag = 'scoped memory for tpu_custom_call.1']
    #allocation23 [shape = 'u8[512]{0}', space=vmem, size = 0x400, scoped, tag = 'input window, operand 10, single buffered']
    #allocation24 [shape = 'u8[16384]{0}', space=vmem, size = 0x4000, scoped, tag = 'input window, operand 11, single buffered']
    #allocation25 [shape = 's32[1]{0}', space=sflag, size = 0x4, scoped, tag = 'scoped memory for tpu_custom_call.1']
    #allocation26 [shape = 'u8[512]{0}', space=vmem, size = 0x400, scoped, tag = 'input window, operand 12, single buffered']
    #allocation27 [shape = 'u8[8192]{0}', space=vmem, size = 0x2000, scoped, tag = 'output window, operand 0']
    #allocation28 [shape = 'u8[16384]{0}', space=vmem, size = 0x4000, scoped, tag = 'output window, operand 1']
    #allocation29 [shape = 's32[2]{0}', space=sflag, size = 0x8, scoped, tag = 'scoped memory for tpu_custom_call.1']
    %20 = vsyncpa [#allocation7], 0
    %s21 = scalar_lea.sflag [#allocation7], 1
    %22 = vsyncpa %s21, 0
    %23 = vsyncpa [#allocation10], 0
    %s24 = scalar_lea.sflag [#allocation10], 1
    %25 = vsyncpa %s24, 0
    %26 = vsyncpa [#allocation13], 0
    %27 = vsyncpa [#allocation16], 0
    %28 = vsyncpa [#allocation19], 0
    %29 = vsyncpa [#allocation22], 0
    %30 = vsyncpa [#allocation25], 0
    %31 = vsyncpa [#allocation8], 0
    %s32 = scalar_lea.sflag [#allocation8], 1
    %33 = vsyncpa %s32, 0
    %34 = vsyncpa [#allocation29], 0
    %s35 = scalar_lea.sflag [#allocation29], 1
    %36 = vsyncpa %s35, 0
    loop: start=0, step=1, limit=4
    $region2: #{tpu_custom_call.1} parent=1 // loop_pre_header
      _
    $region3: #{tpu_custom_call.1} parent=1 // loop_header
      %s38 = sphi 0, %s42
      %p39 = scmp.ge.s32.totalorder %s38, 4
      %s45 = sphi 0, %s57
      %s46 = sphi 0, %s53
      %s47 = sphi 0, %s45
      %s48 = sphi 0, %s46
      %s49 = sphi 0, %s47
      %s50 = sphi 0, %s48
      %s60 = sphi 0, %s62
      %s63 = sphi 0, %s60
      %s64 = sphi 0, %s63
      %s80 = sphi 0, %s64
      %s88 = sphi 0, %s90
      %s91 = sphi 0, %s88
      %s92 = sphi 0, %s91
      %s108 = sphi 0, %s92
      %s116 = sphi 0, %s118
      %s119 = sphi 0, %s116
      %s120 = sphi 0, %s119
      %s136 = sphi 0, %s120
      %s140 = sphi 0, %s140
      %s142 = sphi 0, %s140
      %s143 = sphi 0, %s142
      %s157 = sphi 0, %s143
      %s161 = sphi 0, %s161
      %s163 = sphi 0, %s161
      %s164 = sphi 0, %s163
      %s178 = sphi 0, %s164
      %s182 = sphi 0, %s182
      %s184 = sphi 0, %s182
      %s185 = sphi 0, %s184
      %s199 = sphi 0, %s185
      %s203 = sphi 0, %s203
      %s205 = sphi 0, %s203
      %s206 = sphi 0, %s205
      %s220 = sphi 0, %s206
      %s224 = sphi 0, %s224
      %s226 = sphi 0, %s224
      %s227 = sphi 0, %s226
      %s241 = sphi 0, %s227
      %s245 = sphi 0, %s245
      %s247 = sphi 0, %s245
      %s248 = sphi 0, %s247
      %s262 = sphi 0, %s248
      %s266 = sphi 0, %s266
      %s268 = sphi 0, %s266
      %s269 = sphi 0, %s268
      %s283 = sphi 0, %s269
      %s287 = sphi 0, %s287
      %s289 = sphi 0, %s287
      %s290 = sphi 0, %s289
      %s304 = sphi 0, %s290
      %s308 = sphi 0, %s308
      %s310 = sphi 0, %s308
      %s311 = sphi 0, %s310
      %s325 = sphi 0, %s311
      %s329 = sphi 0, %s329
      %s331 = sphi 0, %s329
      %s332 = sphi 0, %s331
      %s346 = sphi 0, %s332
      %s352 = sphi 0, %s354
      %s355 = sphi 0, %s352
      %s356 = sphi 0, %s355
      %s372 = sphi 0, %s356
      %s380 = sphi 0, %s382
      %s383 = sphi 0, %s380
      %s384 = sphi 0, %s383
      %s400 = sphi 0, %s384
    $region4: #{tpu_custom_call.1} parent=1 // loop_header_branch
      %41 = sbr.rel (%p39) target = $region8
    $region5: #{tpu_custom_call.1} parent=1 // loop_body
      %s43 = ssub.s32 %s38, 1
      %s44 = ssub.s32 %s38, 2
      %s51 = sadd.s32 1, %s46
      %p52 = scmp.ge.s32.totalorder %s51, 1
      %s53 = scalar_select %p52, 0, %s51
      %s54 = sadd.s32 1, %s45
      %s55 = scalar_select %p52, %s54, %s45
      %p56 = scmp.ge.s32.totalorder %s55, 2
      %s57 = scalar_select %p56, 0, %s55
      %s58 = ssub.s32 %s45, %s57
      %p59 = scmp.eq.s32.totalorder %s58, 0
      %s61 = sadd.s32 %s60, 1
      %s62 = scalar_select %p59, %s60, %s61
      %p65 = pneg %p59
      %p66 = scmp.eq.s32.totalorder %s38, 1
      %p67 = por %p65, %p66
      %p68 = scmp.ne.s32.totalorder %s60, %s63
      %p69 = scmp.eq.s32.totalorder %s38, 0
      %p70 = por %p68, %p69
      %p71 = scmp.ne.s32.totalorder %s60, %s63
      %p72 = scmp.eq.s32.totalorder %s43, 1
      %p73 = por %p71, %p72
      %p74 = scmp.ne.s32.totalorder %s63, %s64
      %p75 = scmp.eq.s32.totalorder %s43, 0
      %p76 = por %p74, %p75
      %p77 = scmp.ne.s32.totalorder %s63, %s64
      %p78 = scmp.eq.s32.totalorder %s44, 1
      %p79 = por %p77, %p78
      %p81 = scmp.ne.s32.totalorder %s64, %s80
      %p82 = scmp.eq.s32.totalorder %s44, 0
      %p83 = por %p81, %p82
      %s84 = ssub.s32 %s45, %s57
      %s85 = ssub.s32 %s46, %s53
      %s86 = sor.u32 %s84, %s85
      %p87 = scmp.eq.s32.totalorder %s86, 0
      %s89 = sadd.s32 %s88, 1
      %s90 = scalar_select %p87, %s88, %s89
      %p93 = pneg %p87
      %p94 = scmp.eq.s32.totalorder %s38, 1
      %p95 = por %p93, %p94
      %p96 = scmp.ne.s32.totalorder %s88, %s91
      %p97 = scmp.eq.s32.totalorder %s38, 0
      %p98 = por %p96, %p97
      %p99 = scmp.ne.s32.totalorder %s88, %s91
      %p100 = scmp.eq.s32.totalorder %s43, 1
      %p101 = por %p99, %p100
      %p102 = scmp.ne.s32.totalorder %s91, %s92
      %p103 = scmp.eq.s32.totalorder %s43, 0
      %p104 = por %p102, %p103
      %p105 = scmp.ne.s32.totalorder %s91, %s92
      %p106 = scmp.eq.s32.totalorder %s44, 1
      %p107 = por %p105, %p106
      %p109 = scmp.ne.s32.totalorder %s92, %s108
      %p110 = scmp.eq.s32.totalorder %s44, 0
      %p111 = por %p109, %p110
      %s112 = ssub.s32 %s45, %s57
      %s113 = ssub.s32 %s46, %s53
      %s114 = sor.u32 %s112, %s113
      %p115 = scmp.eq.s32.totalorder %s114, 0
      %s117 = sadd.s32 %s116, 1
      %s118 = scalar_select %p115, %s116, %s117
      %p121 = pneg %p115
      %p122 = scmp.eq.s32.totalorder %s38, 1
      %p123 = por %p121, %p122
      %p124 = scmp.ne.s32.totalorder %s116, %s119
      %p125 = scmp.eq.s32.totalorder %s38, 0
      %p126 = por %p124, %p125
      %p127 = scmp.ne.s32.totalorder %s116, %s119
      %p128 = scmp.eq.s32.totalorder %s43, 1
      %p129 = por %p127, %p128
      %p130 = scmp.ne.s32.totalorder %s119, %s120
      %p131 = scmp.eq.s32.totalorder %s43, 0
      %p132 = por %p130, %p131
      %p133 = scmp.ne.s32.totalorder %s119, %s120
      %p134 = scmp.eq.s32.totalorder %s44, 1
      %p135 = por %p133, %p134
      %p137 = scmp.ne.s32.totalorder %s120, %s136
      %p138 = scmp.eq.s32.totalorder %s44, 0
      %p139 = por %p137, %p138
      %s141 = sadd.s32 %s140, 1
      %p144 = scmp.eq.s32.totalorder %s38, 1
      %p145 = scmp.ne.s32.totalorder %s140, %s142
      %p146 = scmp.eq.s32.totalorder %s38, 0
      %p147 = por %p145, %p146
      %p148 = scmp.ne.s32.totalorder %s140, %s142
      %p149 = scmp.eq.s32.totalorder %s43, 1
      %p150 = por %p148, %p149
      %p151 = scmp.ne.s32.totalorder %s142, %s143
      %p152 = scmp.eq.s32.totalorder %s43, 0
      %p153 = por %p151, %p152
      %p154 = scmp.ne.s32.totalorder %s142, %s143
      %p155 = scmp.eq.s32.totalorder %s44, 1
      %p156 = por %p154, %p155
      %p158 = scmp.ne.s32.totalorder %s143, %s157
      %p159 = scmp.eq.s32.totalorder %s44, 0
      %p160 = por %p158, %p159
      %s162 = sadd.s32 %s161, 1
      %p165 = scmp.eq.s32.totalorder %s38, 1
      %p166 = scmp.ne.s32.totalorder %s161, %s163
      %p167 = scmp.eq.s32.totalorder %s38, 0
      %p168 = por %p166, %p167
      %p169 = scmp.ne.s32.totalorder %s161, %s163
      %p170 = scmp.eq.s32.totalorder %s43, 1
      %p171 = por %p169, %p170
      %p172 = scmp.ne.s32.totalorder %s163, %s164
      %p173 = scmp.eq.s32.totalorder %s43, 0
      %p174 = por %p172, %p173
      %p175 = scmp.ne.s32.totalorder %s163, %s164
      %p176 = scmp.eq.s32.totalorder %s44, 1
      %p177 = por %p175, %p176
      %p179 = scmp.ne.s32.totalorder %s164, %s178
      %p180 = scmp.eq.s32.totalorder %s44, 0
      %p181 = por %p179, %p180
      %s183 = sadd.s32 %s182, 1
      %p186 = scmp.eq.s32.totalorder %s38, 1
      %p187 = scmp.ne.s32.totalorder %s182, %s184
      %p188 = scmp.eq.s32.totalorder %s38, 0
      %p189 = por %p187, %p188
      %p190 = scmp.ne.s32.totalorder %s182, %s184
      %p191 = scmp.eq.s32.totalorder %s43, 1
      %p192 = por %p190, %p191
      %p193 = scmp.ne.s32.totalorder %s184, %s185
      %p194 = scmp.eq.s32.totalorder %s43, 0
      %p195 = por %p193, %p194
      %p196 = scmp.ne.s32.totalorder %s184, %s185
      %p197 = scmp.eq.s32.totalorder %s44, 1
      %p198 = por %p196, %p197
      %p200 = scmp.ne.s32.totalorder %s185, %s199
      %p201 = scmp.eq.s32.totalorder %s44, 0
      %p202 = por %p200, %p201
      %s204 = sadd.s32 %s203, 1
      %p207 = scmp.eq.s32.totalorder %s38, 1
      %p208 = scmp.ne.s32.totalorder %s203, %s205
      %p209 = scmp.eq.s32.totalorder %s38, 0
      %p210 = por %p208, %p209
      %p211 = scmp.ne.s32.totalorder %s203, %s205
      %p212 = scmp.eq.s32.totalorder %s43, 1
      %p213 = por %p211, %p212
      %p214 = scmp.ne.s32.totalorder %s205, %s206
      %p215 = scmp.eq.s32.totalorder %s43, 0
      %p216 = por %p214, %p215
      %p217 = scmp.ne.s32.totalorder %s205, %s206
      %p218 = scmp.eq.s32.totalorder %s44, 1
      %p219 = por %p217, %p218
      %p221 = scmp.ne.s32.totalorder %s206, %s220
      %p222 = scmp.eq.s32.totalorder %s44, 0
      %p223 = por %p221, %p222
      %s225 = sadd.s32 %s224, 1
      %p228 = scmp.eq.s32.totalorder %s38, 1
      %p229 = scmp.ne.s32.totalorder %s224, %s226
      %p230 = scmp.eq.s32.totalorder %s38, 0
      %p231 = por %p229, %p230
      %p232 = scmp.ne.s32.totalorder %s224, %s226
      %p233 = scmp.eq.s32.totalorder %s43, 1
      %p234 = por %p232, %p233
      %p235 = scmp.ne.s32.totalorder %s226, %s227
      %p236 = scmp.eq.s32.totalorder %s43, 0
      %p237 = por %p235, %p236
      %p238 = scmp.ne.s32.totalorder %s226, %s227
      %p239 = scmp.eq.s32.totalorder %s44, 1
      %p240 = por %p238, %p239
      %p242 = scmp.ne.s32.totalorder %s227, %s241
      %p243 = scmp.eq.s32.totalorder %s44, 0
      %p244 = por %p242, %p243
      %s246 = sadd.s32 %s245, 1
      %p249 = scmp.eq.s32.totalorder %s38, 1
      %p250 = scmp.ne.s32.totalorder %s245, %s247
      %p251 = scmp.eq.s32.totalorder %s38, 0
      %p252 = por %p250, %p251
      %p253 = scmp.ne.s32.totalorder %s245, %s247
      %p254 = scmp.eq.s32.totalorder %s43, 1
      %p255 = por %p253, %p254
      %p256 = scmp.ne.s32.totalorder %s247, %s248
      %p257 = scmp.eq.s32.totalorder %s43, 0
      %p258 = por %p256, %p257
      %p259 = scmp.ne.s32.totalorder %s247, %s248
      %p260 = scmp.eq.s32.totalorder %s44, 1
      %p261 = por %p259, %p260
      %p263 = scmp.ne.s32.totalorder %s248, %s262
      %p264 = scmp.eq.s32.totalorder %s44, 0
      %p265 = por %p263, %p264
      %s267 = sadd.s32 %s266, 1
      %p270 = scmp.eq.s32.totalorder %s38, 1
      %p271 = scmp.ne.s32.totalorder %s266, %s268
      %p272 = scmp.eq.s32.totalorder %s38, 0
      %p273 = por %p271, %p272
      %p274 = scmp.ne.s32.totalorder %s266, %s268
      %p275 = scmp.eq.s32.totalorder %s43, 1
      %p276 = por %p274, %p275
      %p277 = scmp.ne.s32.totalorder %s268, %s269
      %p278 = scmp.eq.s32.totalorder %s43, 0
      %p279 = por %p277, %p278
      %p280 = scmp.ne.s32.totalorder %s268, %s269
      %p281 = scmp.eq.s32.totalorder %s44, 1
      %p282 = por %p280, %p281
      %p284 = scmp.ne.s32.totalorder %s269, %s283
      %p285 = scmp.eq.s32.totalorder %s44, 0
      %p286 = por %p284, %p285
      %s288 = sadd.s32 %s287, 1
      %p291 = scmp.eq.s32.totalorder %s38, 1
      %p292 = scmp.ne.s32.totalorder %s287, %s289
      %p293 = scmp.eq.s32.totalorder %s38, 0
      %p294 = por %p292, %p293
      %p295 = scmp.ne.s32.totalorder %s287, %s289
      %p296 = scmp.eq.s32.totalorder %s43, 1
      %p297 = por %p295, %p296
      %p298 = scmp.ne.s32.totalorder %s289, %s290
      %p299 = scmp.eq.s32.totalorder %s43, 0
      %p300 = por %p298, %p299
      %p301 = scmp.ne.s32.totalorder %s289, %s290
      %p302 = scmp.eq.s32.totalorder %s44, 1
      %p303 = por %p301, %p302
      %p305 = scmp.ne.s32.totalorder %s290, %s304
      %p306 = scmp.eq.s32.totalorder %s44, 0
      %p307 = por %p305, %p306
      %s309 = sadd.s32 %s308, 1
      %p312 = scmp.eq.s32.totalorder %s38, 1
      %p313 = scmp.ne.s32.totalorder %s308, %s310
      %p314 = scmp.eq.s32.totalorder %s38, 0
      %p315 = por %p313, %p314
      %p316 = scmp.ne.s32.totalorder %s308, %s310
      %p317 = scmp.eq.s32.totalorder %s43, 1
      %p318 = por %p316, %p317
      %p319 = scmp.ne.s32.totalorder %s310, %s311
      %p320 = scmp.eq.s32.totalorder %s43, 0
      %p321 = por %p319, %p320
      %p322 = scmp.ne.s32.totalorder %s310, %s311
      %p323 = scmp.eq.s32.totalorder %s44, 1
      %p324 = por %p322, %p323
      %p326 = scmp.ne.s32.totalorder %s311, %s325
      %p327 = scmp.eq.s32.totalorder %s44, 0
      %p328 = por %p326, %p327
      %s330 = sadd.s32 %s329, 1
      %p333 = scmp.eq.s32.totalorder %s38, 1
      %p334 = scmp.ne.s32.totalorder %s329, %s331
      %p335 = scmp.eq.s32.totalorder %s38, 0
      %p336 = por %p334, %p335
      %p337 = scmp.ne.s32.totalorder %s329, %s331
      %p338 = scmp.eq.s32.totalorder %s43, 1
      %p339 = por %p337, %p338
      %p340 = scmp.ne.s32.totalorder %s331, %s332
      %p341 = scmp.eq.s32.totalorder %s43, 0
      %p342 = por %p340, %p341
      %p343 = scmp.ne.s32.totalorder %s331, %s332
      %p344 = scmp.eq.s32.totalorder %s44, 1
      %p345 = por %p343, %p344
      %p347 = scmp.ne.s32.totalorder %s332, %s346
      %p348 = scmp.eq.s32.totalorder %s44, 0
      %p349 = por %p347, %p348
      %s350 = ssub.s32 %s45, %s57
      %p351 = scmp.eq.s32.totalorder %s350, 0
      %s353 = sadd.s32 %s352, 1
      %s354 = scalar_select %p351, %s352, %s353
      %p357 = pneg %p351
      %p358 = scmp.eq.s32.totalorder %s38, 1
      %p359 = por %p357, %p358
      %p360 = scmp.ne.s32.totalorder %s352, %s355
      %p361 = scmp.eq.s32.totalorder %s38, 0
      %p362 = por %p360, %p361
      %p363 = scmp.ne.s32.totalorder %s352, %s355
      %p364 = scmp.eq.s32.totalorder %s43, 1
      %p365 = por %p363, %p364
      %p366 = scmp.ne.s32.totalorder %s355, %s356
      %p367 = scmp.eq.s32.totalorder %s43, 0
      %p368 = por %p366, %p367
      %p369 = scmp.ne.s32.totalorder %s355, %s356
      %p370 = scmp.eq.s32.totalorder %s44, 1
      %p371 = por %p369, %p370
      %p373 = scmp.ne.s32.totalorder %s356, %s372
      %p374 = scmp.eq.s32.totalorder %s44, 0
      %p375 = por %p373, %p374
      %s376 = ssub.s32 %s45, %s57
      %s377 = ssub.s32 %s46, %s53
      %s378 = sor.u32 %s376, %s377
      %p379 = scmp.eq.s32.totalorder %s378, 0
      %s381 = sadd.s32 %s380, 1
      %s382 = scalar_select %p379, %s380, %s381
      %p385 = pneg %p379
      %p386 = scmp.eq.s32.totalorder %s38, 1
      %p387 = por %p385, %p386
      %p388 = scmp.ne.s32.totalorder %s380, %s383
      %p389 = scmp.eq.s32.totalorder %s38, 0
      %p390 = por %p388, %p389
      %p391 = scmp.ne.s32.totalorder %s380, %s383
      %p392 = scmp.eq.s32.totalorder %s43, 1
      %p393 = por %p391, %p392
      %p394 = scmp.ne.s32.totalorder %s383, %s384
      %p395 = scmp.eq.s32.totalorder %s43, 0
      %p396 = por %p394, %p395
      %p397 = scmp.ne.s32.totalorder %s383, %s384
      %p398 = scmp.eq.s32.totalorder %s44, 1
      %p399 = por %p397, %p398
      %p401 = scmp.ne.s32.totalorder %s384, %s400
      %p402 = scmp.eq.s32.totalorder %s44, 0
      %p403 = por %p401, %p402
      %p404 = scmp.le.s32.totalorder 1, %s38
      %p405 = scmp.lt.s32.totalorder %s38, 3
      %p406 = pnand %p404, %p405
      %p407 = pneg %p406
      // Predicated region
      $region9: #{tpu_custom_call.1} parent=5 // pred_check
        _
      $region10: #{tpu_custom_call.1} parent=5 // pred_check_branch
        %409 = sbr.rel (%p406) target = $region12
      $region11: #{tpu_custom_call.1} parent=5 // pred_region
        %s410 = ssub.s32 %s38, 1
        // Predicated region
        $region13: #{tpu_custom_call.1} parent=11 // pred_check
          %p411 = pneg %p153
        $region14: #{tpu_custom_call.1} parent=11 // pred_check_branch
          %413 = sbr.rel (%p411) target = $region16
        $region15: #{tpu_custom_call.1} parent=11 // pred_region
          %s415 = ssub.s32 256, 256
          %416 = vsyncadd [#allocation13], %s415
          %s417 = sshll.u32 [#allocation12], 4
          %s418 = int_to_ptr.vmem [resolvable:$true] %s417
          %423 = dma.hbm_to_vmem [thread:$0]  %s3, 256, %s418, [#allocation13], 64, 64, 4
        $region16: #{tpu_custom_call.1} parent=11 // pred_fallthru
          _
        // Predicated region
        $region17: #{tpu_custom_call.1} parent=11 // pred_check
          %p424 = pneg %p174
        $region18: #{tpu_custom_call.1} parent=11 // pred_check_branch
          %426 = sbr.rel (%p424) target = $region20
        $region19: #{tpu_custom_call.1} parent=11 // pred_region
          %s428 = ssub.s32 16, 16
          %429 = vsyncadd [#allocation13], %s428
          %s431 = sshll.u32 [#allocation14], 4
          %s432 = int_to_ptr.vmem [resolvable:$true] %s431
          %434 = dma.hbm_to_vmem [thread:$0]  %s4, 16, %s432, [#allocation13]
        $region20: #{tpu_custom_call.1} parent=11 // pred_fallthru
          _
        // Predicated region
        $region21: #{tpu_custom_call.1} parent=11 // pred_check
          %p435 = pneg %p195
        $region22: #{tpu_custom_call.1} parent=11 // pred_check_branch
          %437 = sbr.rel (%p435) target = $region24
        $region23: #{tpu_custom_call.1} parent=11 // pred_region
          %s439 = ssub.s32 128, 128
          %440 = vsyncadd [#allocation16], %s439
          %s441 = sshll.u32 [#allocation15], 4
          %s442 = int_to_ptr.vmem [resolvable:$true] %s441
          %447 = dma.hbm_to_vmem [thread:$0]  %s5, 128, %s442, [#allocation16], 64, 64, 4
        $region24: #{tpu_custom_call.1} parent=11 // pred_fallthru
          _
        // Predicated region
        $region25: #{tpu_custom_call.1} parent=11 // pred_check
          %p448 = pneg %p216
        $region26: #{tpu_custom_call.1} parent=11 // pred_check_branch
          %450 = sbr.rel (%p448) target = $region28
        $region27: #{tpu_custom_call.1} parent=11 // pred_region
          %s452 = ssub.s32 16, 16
          %453 = vsyncadd [#allocation16], %s452
          %s455 = sshll.u32 [#allocation17], 4
          %s456 = int_to_ptr.vmem [resolvable:$true] %s455
          %458 = dma.hbm_to_vmem [thread:$0]  %s6, 16, %s456, [#allocation16]
        $region28: #{tpu_custom_call.1} parent=11 // pred_fallthru
          _
        // Predicated region
        $region29: #{tpu_custom_call.1} parent=11 // pred_check
          %p459 = pneg %p237
        $region30: #{tpu_custom_call.1} parent=11 // pred_check_branch
          %461 = sbr.rel (%p459) target = $region32
        $region31: #{tpu_custom_call.1} parent=11 // pred_region
          %s463 = ssub.s32 32, 32
          %464 = vsyncadd [#allocation19], %s463
          %s466 = sshll.u32 [#allocation18], 4
          %s467 = int_to_ptr.vmem [resolvable:$true] %s466
          %469 = dma.hbm_to_vmem [thread:$0]  %s7, 32, %s467, [#allocation19]
        $region32: #{tpu_custom_call.1} parent=11 // pred_fallthru
          _
        // Predicated region
        $region33: #{tpu_custom_call.1} parent=11 // pred_check
          %p470 = pneg %p258
        $region34: #{tpu_custom_call.1} parent=11 // pred_check_branch
          %472 = sbr.rel (%p470) target = $region36
        $region35: #{tpu_custom_call.1} parent=11 // pred_region
          %s474 = ssub.s32 32, 32
          %475 = vsyncadd [#allocation19], %s474
          %s477 = sshll.u32 [#allocation20], 4
          %s478 = int_to_ptr.vmem [resolvable:$true] %s477
          %480 = dma.hbm_to_vmem [thread:$0]  %s8, 32, %s478, [#allocation19]
        $region36: #{tpu_custom_call.1} parent=11 // pred_fallthru
          _
        // Predicated region
        $region37: #{tpu_custom_call.1} parent=11 // pred_check
          %p481 = pneg %p279
        $region38: #{tpu_custom_call.1} parent=11 // pred_check_branch
          %483 = sbr.rel (%p481) target = $region40
        $region39: #{tpu_custom_call.1} parent=11 // pred_region
          %s485 = ssub.s32 256, 256
          %486 = vsyncadd [#allocation22], %s485
          %s487 = sshll.u32 [#allocation21], 4
          %s488 = int_to_ptr.vmem [resolvable:$true] %s487
          %493 = dma.hbm_to_vmem [thread:$0]  %s9, 256, %s488, [#allocation22], 64, 64, 4
        $region40: #{tpu_custom_call.1} parent=11 // pred_fallthru
          _
        // Predicated region
        $region41: #{tpu_custom_call.1} parent=11 // pred_check
          %p494 = pneg %p300
        $region42: #{tpu_custom_call.1} parent=11 // pred_check_branch
          %496 = sbr.rel (%p494) target = $region44
        $region43: #{tpu_custom_call.1} parent=11 // pred_region
          %s498 = ssub.s32 16, 16
          %499 = vsyncadd [#allocation22], %s498
          %s501 = sshll.u32 [#allocation23], 4
          %s502 = int_to_ptr.vmem [resolvable:$true] %s501
          %504 = dma.hbm_to_vmem [thread:$0]  %s10, 16, %s502, [#allocation22]
        $region44: #{tpu_custom_call.1} parent=11 // pred_fallthru
          _
        // Predicated region
        $region45: #{tpu_custom_call.1} parent=11 // pred_check
          %p505 = pneg %p321
        $region46: #{tpu_custom_call.1} parent=11 // pred_check_branch
          %507 = sbr.rel (%p505) target = $region48
        $region47: #{tpu_custom_call.1} parent=11 // pred_region
          %s509 = ssub.s32 512, 512
          %510 = vsyncadd [#allocation25], %s509
          %s511 = sshll.u32 [#allocation24], 4
          %s512 = int_to_ptr.vmem [resolvable:$true] %s511
          %517 = dma.hbm_to_vmem [thread:$0]  %s11, 512, %s512, [#allocation25], 64, 64, 4
        $region48: #{tpu_custom_call.1} parent=11 // pred_fallthru
          _
        // Predicated region
        $region49: #{tpu_custom_call.1} parent=11 // pred_check
          %p518 = pneg %p342
        $region50: #{tpu_custom_call.1} parent=11 // pred_check_branch
          %520 = sbr.rel (%p518) target = $region52
        $region51: #{tpu_custom_call.1} parent=11 // pred_region
          %s522 = ssub.s32 16, 16
          %523 = vsyncadd [#allocation25], %s522
          %s525 = sshll.u32 [#allocation26], 4
          %s526 = int_to_ptr.vmem [resolvable:$true] %s525
          %528 = dma.hbm_to_vmem [thread:$0]  %s12, 16, %s526, [#allocation25]
        $region52: #{tpu_custom_call.1} parent=11 // pred_fallthru
          _
      $region12: #{tpu_custom_call.1} parent=5 // pred_fallthru
        _
      %p529 = scmp.lt.s32.totalorder %s38, 2
      // Predicated region
      $region53: #{tpu_custom_call.1} parent=5 // pred_check
        %p530 = pneg %p529
      $region54: #{tpu_custom_call.1} parent=5 // pred_check_branch
        %532 = sbr.rel (%p530) target = $region56
      $region55: #{tpu_custom_call.1} parent=5 // pred_region
        // Predicated region
        $region57: #{tpu_custom_call.1} parent=55 // pred_check
          %p533 = pneg %p70
        $region58: #{tpu_custom_call.1} parent=55 // pred_check_branch
          %535 = sbr.rel (%p533) target = $region60
        $region59: #{tpu_custom_call.1} parent=55 // pred_region
          %s536 = sand.u32 %s60, 1
          %s537 = scalar_lea.sflag [#allocation7], %s536
          %s538 = sand.u32 %s60, 1
          %s539 = smul.addr %s538, 8
          %s540 = scalar_lea.vmem [#allocation6], %s539
          %s542 = ssub.s32 128, 128
          %543 = vsyncadd %s537, %s542
          %s544 = smul.addr %s45, 128
          %s545 = scalar_lea.hbm %s0, %s544
          %s547 = sshll.u32 %s540, 4
          %s548 = int_to_ptr.vmem [resolvable:$true] %s547
          %550 = dma.hbm_to_vmem [thread:$0]  %s545, 128, %s548, %s537
        $region60: #{tpu_custom_call.1} parent=55 // pred_fallthru
          _
        // Predicated region
        $region61: #{tpu_custom_call.1} parent=55 // pred_check
          %p551 = pneg %p98
        $region62: #{tpu_custom_call.1} parent=55 // pred_check_branch
          %553 = sbr.rel (%p551) target = $region64
        $region63: #{tpu_custom_call.1} parent=55 // pred_region
          %s554 = sand.u32 %s38, 1
          %s555 = scalar_lea.sflag [#allocation10], %s554
          %s556 = sand.u32 %s88, 1
          %s557 = smul.addr %s556, 16
          %s558 = scalar_lea.vmem [#allocation9], %s557
          %s559 = smul.u32 2, %s46
          %s561 = ssub.s32 256, 256
          %562 = vsyncadd %s555, %s561
          %s563 = smul.addr %s45, 2
          %s564 = sadd.s32 %s559, %s563
          %s565 = smul.addr %s564, 128
          %s566 = scalar_lea.hbm %s1, %s565
          %s567 = sshll.u32 %s558, 4
          %s568 = int_to_ptr.vmem [resolvable:$true] %s567
          %573 = dma.hbm_to_vmem [thread:$0]  %s566, 256, %s568, %s555, 128, 128, 8
        $region64: #{tpu_custom_call.1} parent=55 // pred_fallthru
          _
        // Predicated region
        $region65: #{tpu_custom_call.1} parent=55 // pred_check
          %p574 = pneg %p126
        $region66: #{tpu_custom_call.1} parent=55 // pred_check_branch
          %576 = sbr.rel (%p574) target = $region68
        $region67: #{tpu_custom_call.1} parent=55 // pred_region
          %s577 = sand.u32 %s38, 1
          %s578 = scalar_lea.sflag [#allocation10], %s577
          %s579 = sand.u32 %s116, 1
          %s580 = smul.addr %s579, 16
          %s581 = scalar_lea.vmem [#allocation11], %s580
          %s582 = smul.u32 2, %s46
          %s584 = ssub.s32 256, 256
          %585 = vsyncadd %s578, %s584
          %s586 = smul.addr %s45, 2
          %s587 = sadd.s32 %s582, %s586
          %s588 = smul.addr %s587, 128
          %s589 = scalar_lea.hbm %s2, %s588
          %s590 = sshll.u32 %s581, 4
          %s591 = int_to_ptr.vmem [resolvable:$true] %s590
          %596 = dma.hbm_to_vmem [thread:$0]  %s589, 256, %s591, %s578, 128, 128, 8
        $region68: #{tpu_custom_call.1} parent=55 // pred_fallthru
          _
      $region56: #{tpu_custom_call.1} parent=5 // pred_fallthru
        _
      %p597 = scmp.le.s32.totalorder 1, %s38
      %p598 = scmp.lt.s32.totalorder %s38, 3
      %p599 = pnand %p597, %p598
      %p600 = pneg %p599
      // Predicated region
      $region69: #{tpu_custom_call.1} parent=5 // pred_check
        _
      $region70: #{tpu_custom_call.1} parent=5 // pred_check_branch
        %602 = sbr.rel (%p599) target = $region72
      $region71: #{tpu_custom_call.1} parent=5 // pred_region
        %s603 = ssub.s32 %s38, 1
        %s604 = sand.u32 %s63, 1
        %s605 = scalar_lea.sflag [#allocation7], %s604
        %s606 = sand.u32 %s63, 1
        %s607 = smul.addr %s606, 8
        %s608 = scalar_lea.vmem [#allocation6], %s607
        // Predicated region
        $region73: #{tpu_custom_call.1} parent=71 // pred_check
          %p609 = pneg %p76
        $region74: #{tpu_custom_call.1} parent=71 // pred_check_branch
          %611 = sbr.rel (%p609) target = $region76
        $region75: #{tpu_custom_call.1} parent=71 // pred_region
          %612 = dma.done %s605, 128
        $region76: #{tpu_custom_call.1} parent=71 // pred_fallthru
          _
        %s613 = sand.u32 %s43, 1
        %s614 = scalar_lea.sflag [#allocation10], %s613
        %s615 = sand.u32 %s91, 1
        %s616 = smul.addr %s615, 16
        %s617 = scalar_lea.vmem [#allocation9], %s616
        // Predicated region
        $region77: #{tpu_custom_call.1} parent=71 // pred_check
          %p618 = pneg %p104
        $region78: #{tpu_custom_call.1} parent=71 // pred_check_branch
          %620 = sbr.rel (%p618) target = $region80
        $region79: #{tpu_custom_call.1} parent=71 // pred_region
          %621 = dma.done %s614, 256
        $region80: #{tpu_custom_call.1} parent=71 // pred_fallthru
          _
        %s622 = sand.u32 %s43, 1
        %s623 = scalar_lea.sflag [#allocation10], %s622
        %s624 = sand.u32 %s119, 1
        %s625 = smul.addr %s624, 16
        %s626 = scalar_lea.vmem [#allocation11], %s625
        // Predicated region
        $region81: #{tpu_custom_call.1} parent=71 // pred_check
          %p627 = pneg %p132
        $region82: #{tpu_custom_call.1} parent=71 // pred_check_branch
          %629 = sbr.rel (%p627) target = $region84
        $region83: #{tpu_custom_call.1} parent=71 // pred_region
          %630 = dma.done %s623, 256
        $region84: #{tpu_custom_call.1} parent=71 // pred_fallthru
          _
        // Predicated region
        $region85: #{tpu_custom_call.1} parent=71 // pred_check
          %p631 = pneg %p153
        $region86: #{tpu_custom_call.1} parent=71 // pred_check_branch
          %633 = sbr.rel (%p631) target = $region88
        $region87: #{tpu_custom_call.1} parent=71 // pred_region
          %634 = dma.done [#allocation13], 256
        $region88: #{tpu_custom_call.1} parent=71 // pred_fallthru
          _
        // Predicated region
        $region89: #{tpu_custom_call.1} parent=71 // pred_check
          %p635 = pneg %p174
        $region90: #{tpu_custom_call.1} parent=71 // pred_check_branch
          %637 = sbr.rel (%p635) target = $region92
        $region91: #{tpu_custom_call.1} parent=71 // pred_region
          %638 = dma.done [#allocation13], 16
        $region92: #{tpu_custom_call.1} parent=71 // pred_fallthru
          _
        // Predicated region
        $region93: #{tpu_custom_call.1} parent=71 // pred_check
          %p639 = pneg %p195
        $region94: #{tpu_custom_call.1} parent=71 // pred_check_branch
          %641 = sbr.rel (%p639) target = $region96
        $region95: #{tpu_custom_call.1} parent=71 // pred_region
          %642 = dma.done [#allocation16], 128
        $region96: #{tpu_custom_call.1} parent=71 // pred_fallthru
          _
        // Predicated region
        $region97: #{tpu_custom_call.1} parent=71 // pred_check
          %p643 = pneg %p216
        $region98: #{tpu_custom_call.1} parent=71 // pred_check_branch
          %645 = sbr.rel (%p643) target = $region100
        $region99: #{tpu_custom_call.1} parent=71 // pred_region
          %646 = dma.done [#allocation16], 16
        $region100: #{tpu_custom_call.1} parent=71 // pred_fallthru
          _
        // Predicated region
        $region101: #{tpu_custom_call.1} parent=71 // pred_check
          %p647 = pneg %p237
        $region102: #{tpu_custom_call.1} parent=71 // pred_check_branch
          %649 = sbr.rel (%p647) target = $region104
        $region103: #{tpu_custom_call.1} parent=71 // pred_region
          %650 = dma.done [#allocation19], 32
        $region104: #{tpu_custom_call.1} parent=71 // pred_fallthru
          _
        // Predicated region
        $region105: #{tpu_custom_call.1} parent=71 // pred_check
          %p651 = pneg %p258
        $region106: #{tpu_custom_call.1} parent=71 // pred_check_branch
          %653 = sbr.rel (%p651) target = $region108
        $region107: #{tpu_custom_call.1} parent=71 // pred_region
          %654 = dma.done [#allocation19], 32
        $region108: #{tpu_custom_call.1} parent=71 // pred_fallthru
          _
        // Predicated region
        $region109: #{tpu_custom_call.1} parent=71 // pred_check
          %p655 = pneg %p279
        $region110: #{tpu_custom_call.1} parent=71 // pred_check_branch
          %657 = sbr.rel (%p655) target = $region112
        $region111: #{tpu_custom_call.1} parent=71 // pred_region
          %658 = dma.done [#allocation22], 256
        $region112: #{tpu_custom_call.1} parent=71 // pred_fallthru
          _
        // Predicated region
        $region113: #{tpu_custom_call.1} parent=71 // pred_check
          %p659 = pneg %p300
        $region114: #{tpu_custom_call.1} parent=71 // pred_check_branch
          %661 = sbr.rel (%p659) target = $region116
        $region115: #{tpu_custom_call.1} parent=71 // pred_region
          %662 = dma.done [#allocation22], 16
        $region116: #{tpu_custom_call.1} parent=71 // pred_fallthru
          _
        // Predicated region
        $region117: #{tpu_custom_call.1} parent=71 // pred_check
          %p663 = pneg %p321
        $region118: #{tpu_custom_call.1} parent=71 // pred_check_branch
          %665 = sbr.rel (%p663) target = $region120
        $region119: #{tpu_custom_call.1} parent=71 // pred_region
          %666 = dma.done [#allocation25], 512
        $region120: #{tpu_custom_call.1} parent=71 // pred_fallthru
          _
        // Predicated region
        $region121: #{tpu_custom_call.1} parent=71 // pred_check
          %p667 = pneg %p342
        $region122: #{tpu_custom_call.1} parent=71 // pred_check_branch
          %669 = sbr.rel (%p667) target = $region124
        $region123: #{tpu_custom_call.1} parent=71 // pred_region
          %670 = dma.done [#allocation25], 16
        $region124: #{tpu_custom_call.1} parent=71 // pred_fallthru
          _
        %s671 = sand.u32 %s63, 1
        %s672 = scalar_lea.sflag [#allocation7], %s671
        %s673 = sand.u32 %s63, 1
        %s674 = smul.addr %s673, 8
        %s675 = scalar_lea.vmem [#allocation6], %s674
        %p676 = pneg %p76
        %p677 = pneg %p73
        %s678 = sand.u32 %s43, 1
        %s679 = scalar_lea.sflag [#allocation10], %s678
        %s680 = sand.u32 %s91, 1
        %s681 = smul.addr %s680, 16
        %s682 = scalar_lea.vmem [#allocation9], %s681
        %p683 = pneg %p104
        %p684 = pneg %p101
        %s685 = sand.u32 %s43, 1
        %s686 = scalar_lea.sflag [#allocation10], %s685
        %s687 = sand.u32 %s119, 1
        %s688 = smul.addr %s687, 16
        %s689 = scalar_lea.vmem [#allocation11], %s688
        %p690 = pneg %p132
        %p691 = pneg %p129
        %p692 = pneg %p153
        %p693 = pneg %p150
        %p694 = pneg %p174
        %p695 = pneg %p171
        %p696 = pneg %p195
        %p697 = pneg %p192
        %p698 = pneg %p216
        %p699 = pneg %p213
        %p700 = pneg %p237
        %p701 = pneg %p234
        %p702 = pneg %p258
        %p703 = pneg %p255
        %p704 = pneg %p279
        %p705 = pneg %p276
        %p706 = pneg %p300
        %p707 = pneg %p297
        %p708 = pneg %p321
        %p709 = pneg %p318
        %p710 = pneg %p342
        %p711 = pneg %p339
        %p712 = pneg %p368
        %p713 = pneg %p365
        %s714 = sand.u32 %s355, 1
        %s715 = scalar_lea.sflag [#allocation8], %s714
        %s716 = sand.u32 %s355, 1
        %s717 = smul.addr %s716, 8
        %s718 = scalar_lea.vmem [#allocation27], %s717
        %p719 = pneg %p396
        %p720 = pneg %p393
        %s721 = sand.u32 %s383, 1
        %s722 = scalar_lea.sflag [#allocation29], %s721
        %s723 = sand.u32 %s383, 1
        %s724 = smul.addr %s723, 16
        %s725 = scalar_lea.vmem [#allocation28], %s724
        %s726 = smul.u32 2, %s48
        %s727 = smul.u32 2, %s48
        %v729 = vld [vmem:[#allocation12] sm:$0xf]
        %v730 = vld [vmem:[#allocation12 + $0x4] sm:$0xf]
        %v731 = vld [vmem:[#allocation12 + $0x8] sm:$0xf]
        %v732 = vld [vmem:[#allocation12 + $0xc] sm:$0xf]
        %v733 = vld [vmem:[#allocation14] sm:$0x1]
        %p734 = scmp.eq.s32.totalorder %s48, 0
        // Predicated region
        $region125: #{tpu_custom_call.1} parent=71 // pred_check
          %p735 = pneg %p734
        $region126: #{tpu_custom_call.1} parent=71 // pred_check_branch
          %737 = sbr.rel (%p735) target = $region128
        $region127: #{tpu_custom_call.1} parent=71 // pred_region
          %v738 = vld [vmem:[%s608] sm:$0xff]
          %v739 = vpack.c.bf16 %v738, %v738
          %v741 = vlaneseq
          %v742 = vshrl.u32 %v741, 7
          %v743 = vsub.s32 0, %v742
          %v744 = vrot.slane %v733, %v743
          %v750 = vunpack.c.l.b16 %v729
          %v751 = vunpack.c.l.b16 %v730
          %v752 = vunpack.c.l.b16 %v731
          %v753 = vunpack.c.l.b16 %v732
          %v754 = vpack.c.b16 %v751, %v750
          %v755 = vpack.c.b16 %v753, %v752
          %vm758 = vcmask 261120
          %v760 = vsel %vm758, %v739, 0
          %762 = vmatprep.subr.bf16.mxu0 0
          %763 = vmatpush1.bf16.msra.mxu0 %v754
          %764 = vmatprep.subr.bf16.mxu0 0
          %765 = vmatpush1.bf16.msra.mxu0 %v755
          %766 = vmatprep.subr.bf16.mxu0 0
          %767 = vmatpush1.bf16.msra.mxu0 0
          %768 = vmatprep.subr.bf16.mxu0 0
          %769 = vmatpush1.bf16.msra.mxu0 0
          %770 = vmatprep.subr.bf16.mxu0 0
          %771 = vmatpush1.bf16.msra.mxu0 0
          %772 = vmatprep.subr.bf16.mxu0 0
          %773 = vmatpush1.bf16.msra.mxu0 0
          %774 = vmatprep.subr.bf16.mxu0 0
          %775 = vmatpush1.bf16.msra.mxu0 0
          %776 = vmatprep.subr.bf16.mxu0 0
          %777 = vmatpush1.bf16.msra.mxu0 0
          %778 = vmatprep.subr.bf16.mxu0 0
          %779 = vmatpush1.bf16.msra.mxu0 0
          %780 = vmatprep.subr.bf16.mxu0 0
          %781 = vmatpush1.bf16.msra.mxu0 0
          %782 = vmatprep.subr.bf16.mxu0 0
          %783 = vmatpush1.bf16.msra.mxu0 0
          %784 = vmatprep.subr.bf16.mxu0 0
          %785 = vmatpush1.bf16.msra.mxu0 0
          %786 = vmatprep.subr.bf16.mxu0 0
          %787 = vmatpush1.bf16.msra.mxu0 0
          %788 = vmatprep.subr.bf16.mxu0 0
          %789 = vmatpush1.bf16.msra.mxu0 0
          %790 = vmatprep.subr.bf16.mxu0 0
          %791 = vmatpush1.bf16.msra.mxu0 0
          %792 = vmatprep.subr.bf16.mxu0 0
          %793 = vmatpush1.bf16.msra.mxu0 0
          %794 = vmatprep.mubr.bf16.mxu0 0
          %795 = vmatmul.mubr.bf16.gmra.mrb[0].mxu0 %v760
          %v796 = vpop.f32.mrb[0].mxu0
          %v797 = vadd.f32 %v744, %v796
          %v798 = vpop.f32.mrb[0].mxu0
          %v799 = vpop.f32.mrb[0].mxu0
          %v800 = vpop.f32.mrb[0].mxu0
          %801 = vdwg.mxu0
          %vm802 = vcmask 130048
          %803 = vst.msk [vmem:[#allocation2] sm:$0xff] %vm802, %v797
          %vm804 = vcmask 15360
          %805 = vst.msk [vmem:[#allocation3] sm:$0xff] %vm804, -inf
          %806 = vst.msk [vmem:[#allocation4] sm:$0xff] %vm804, 0.0
          %807 = vst.msk [vmem:[#allocation5] sm:$0xff] %vm802, 0.0
        $region128: #{tpu_custom_call.1} parent=71 // pred_fallthru
          _
        %v808 = vld [vmem:[%s617] sm:$0xff]
        %v809 = vld [vmem:[%s617 + $0x8] sm:$0xff]
        %v810 = vld [vmem:[%s626] sm:$0xff]
        %v811 = vld [vmem:[%s626 + $0x8] sm:$0xff]
        %v812 = vadd.f32 %v808, %v810
        %v813 = vadd.f32 %v809, %v811
        %v814 = vpack.c.bf16 %v813, %v812
        %v816 = vlaneseq
        %v817 = vshrl.u32 %v816, 7
        %v818 = vsub.s32 0, %v817
        %v819 = vrot.slane %v733, %v818
        %v824 = vunpack.c.l.b16 %v729
        %v825 = vunpack.c.l.b16 %v730
        %v826 = vunpack.c.l.b16 %v731
        %v827 = vunpack.c.l.b16 %v732
        %v828 = vpack.c.b16 %v825, %v824
        %v829 = vpack.c.b16 %v827, %v826
        %830 = vrot.lane.b32.xlu0 %v828, 112
        %v831 = vpop.permute.xlu0 %830
        %832 = vrot.lane.b32.xlu0 %v829, 112
        %v833 = vpop.permute.xlu0 %832
        %836 = vrot.lane.b32.xlu0 %v819, 112
        %v837 = vpop.permute.xlu0 %836
        %vm839 = vcmask 261120
        %v841 = vsel %vm839, %v814, 0
        %843 = vmatprep.subr.bf16.mxu0 0
        %844 = vmatpush1.bf16.msra.mxu0 %v831
        %845 = vmatprep.subr.bf16.mxu0 0
        %846 = vmatpush1.bf16.msra.mxu0 %v833
        %847 = vmatprep.subr.bf16.mxu0 0
        %848 = vmatpush1.bf16.msra.mxu0 0
        %849 = vmatprep.subr.bf16.mxu0 0
        %850 = vmatpush1.bf16.msra.mxu0 0
        %851 = vmatprep.subr.bf16.mxu0 0
        %852 = vmatpush1.bf16.msra.mxu0 0
        %853 = vmatprep.subr.bf16.mxu0 0
        %854 = vmatpush1.bf16.msra.mxu0 0
        %855 = vmatprep.subr.bf16.mxu0 0
        %856 = vmatpush1.bf16.msra.mxu0 0
        %857 = vmatprep.subr.bf16.mxu0 0
        %858 = vmatpush1.bf16.msra.mxu0 0
        %859 = vmatprep.subr.bf16.mxu0 0
        %860 = vmatpush1.bf16.msra.mxu0 0
        %861 = vmatprep.subr.bf16.mxu0 0
        %862 = vmatpush1.bf16.msra.mxu0 0
        %863 = vmatprep.subr.bf16.mxu0 0
        %864 = vmatpush1.bf16.msra.mxu0 0
        %865 = vmatprep.subr.bf16.mxu0 0
        %866 = vmatpush1.bf16.msra.mxu0 0
        %867 = vmatprep.subr.bf16.mxu0 0
        %868 = vmatpush1.bf16.msra.mxu0 0
        %869 = vmatprep.subr.bf16.mxu0 0
        %870 = vmatpush1.bf16.msra.mxu0 0
        %871 = vmatprep.subr.bf16.mxu0 0
        %872 = vmatpush1.bf16.msra.mxu0 0
        %873 = vmatprep.subr.bf16.mxu0 0
        %874 = vmatpush1.bf16.msra.mxu0 0
        %875 = vmatprep.mubr.bf16.mxu0 0
        %876 = vmatmul.mubr.bf16.gmra.mrb[0].mxu0 %v841
        %v877 = vpop.f32.mrb[0].mxu0
        %v878 = vadd.f32 %v837, %v877
        %v879 = vpop.f32.mrb[0].mxu0
        %v880 = vpop.f32.mrb[0].mxu0
        %v881 = vadd.f32 %v837, %v880
        %v882 = vpop.f32.mrb[0].mxu0
        %883 = vdwg.mxu0
        %v884 = vpack.c.bf16 %v809, %v808
        %885 = vrot.lane.b32.xlu0 %v828, 96
        %v886 = vpop.permute.xlu0 %885
        %887 = vrot.lane.b32.xlu0 %v829, 96
        %v888 = vpop.permute.xlu0 %887
        %891 = vrot.lane.b32.xlu0 %v819, 96
        %v892 = vpop.permute.xlu0 %891
        %v895 = vsel %vm839, %v884, 0
        %897 = vmatprep.subr.bf16.mxu0 0
        %898 = vmatpush1.bf16.msra.mxu0 %v886
        %899 = vmatprep.subr.bf16.mxu0 0
        %900 = vmatpush1.bf16.msra.mxu0 %v888
        %901 = vmatprep.subr.bf16.mxu0 0
        %902 = vmatpush1.bf16.msra.mxu0 0
        %903 = vmatprep.subr.bf16.mxu0 0
        %904 = vmatpush1.bf16.msra.mxu0 0
        %905 = vmatprep.subr.bf16.mxu0 0
        %906 = vmatpush1.bf16.msra.mxu0 0
        %907 = vmatprep.subr.bf16.mxu0 0
        %908 = vmatpush1.bf16.msra.mxu0 0
        %909 = vmatprep.subr.bf16.mxu0 0
        %910 = vmatpush1.bf16.msra.mxu0 0
        %911 = vmatprep.subr.bf16.mxu0 0
        %912 = vmatpush1.bf16.msra.mxu0 0
        %913 = vmatprep.subr.bf16.mxu0 0
        %914 = vmatpush1.bf16.msra.mxu0 0
        %915 = vmatprep.subr.bf16.mxu0 0
        %916 = vmatpush1.bf16.msra.mxu0 0
        %917 = vmatprep.subr.bf16.mxu0 0
        %918 = vmatpush1.bf16.msra.mxu0 0
        %919 = vmatprep.subr.bf16.mxu0 0
        %920 = vmatpush1.bf16.msra.mxu0 0
        %921 = vmatprep.subr.bf16.mxu0 0
        %922 = vmatpush1.bf16.msra.mxu0 0
        %923 = vmatprep.subr.bf16.mxu0 0
        %924 = vmatpush1.bf16.msra.mxu0 0
        %925 = vmatprep.subr.bf16.mxu0 0
        %926 = vmatpush1.bf16.msra.mxu0 0
        %927 = vmatprep.subr.bf16.mxu0 0
        %928 = vmatpush1.bf16.msra.mxu0 0
        %929 = vmatprep.mubr.bf16.mxu0 0
        %930 = vmatmul.mubr.bf16.gmra.mrb[0].mxu0 %v895
        %v931 = vpop.f32.mrb[0].mxu0
        %v932 = vadd.f32 %v892, %v931
        %v933 = vpop.f32.mrb[0].mxu0
        %v934 = vpop.f32.mrb[0].mxu0
        %v935 = vadd.f32 %v892, %v934
        %v936 = vpop.f32.mrb[0].mxu0
        %937 = vdwg.mxu0
        %v938 = vld [vmem:[#allocation2] sm:$0xff]
        %vm939 = vcmask 64512
        %v941 = vsel %vm939, %v938, 0
        %v944 = vsel %vm939, %v878, 0
        %v947 = vsel %vm939, %v881, 0
        %949 = vmatprep.subr.mxu0 0.0
        %950 = vmatpush1.xpose.msra.mxu0 %v944
        %951 = vmatprep.subr.mxu0 0.0
        %952 = vmatpush1.xpose.msra.mxu0 %v947
        %953 = vmatprep.subr.mxu0 0.0
        %954 = vmatpush1.xpose.msra.mxu0 0.0
        %955 = vmatprep.subr.mxu0 0.0
        %956 = vmatpush1.xpose.msra.mxu0 0.0
        %957 = vmatprep.subr.mxu0 0.0
        %958 = vmatpush1.xpose.msra.mxu0 0.0
        %959 = vmatprep.subr.mxu0 0.0
        %960 = vmatpush1.xpose.msra.mxu0 0.0
        %961 = vmatprep.subr.mxu0 0.0
        %962 = vmatpush1.xpose.msra.mxu0 0.0
        %963 = vmatprep.subr.mxu0 0.0
        %964 = vmatpush1.xpose.msra.mxu0 0.0
        %965 = vmatprep.subr.mxu0 0.0
        %966 = vmatpush1.xpose.msra.mxu0 0.0
        %967 = vmatprep.subr.mxu0 0.0
        %968 = vmatpush1.xpose.msra.mxu0 0.0
        %969 = vmatprep.subr.mxu0 0.0
        %970 = vmatpush1.xpose.msra.mxu0 0.0
        %971 = vmatprep.subr.mxu0 0.0
        %972 = vmatpush1.xpose.msra.mxu0 0.0
        %973 = vmatprep.subr.mxu0 0.0
        %974 = vmatpush1.xpose.msra.mxu0 0.0
        %975 = vmatprep.subr.mxu0 0.0
        %976 = vmatpush1.xpose.msra.mxu0 0.0
        %977 = vmatprep.subr.mxu0 0.0
        %978 = vmatpush1.xpose.msra.mxu0 0.0
        %979 = vmatprep.subr.mxu0 0.0
        %980 = vmatpush1.xpose.msra.mxu0 0.0
        %981 = vmatprep.subr.mxu0 0.0
        %982 = vmatpush1.xpose.msra.mxu0 0.0
        %983 = vmatprep.subr.mxu0 0.0
        %984 = vmatpush1.xpose.msra.mxu0 0.0
        %985 = vmatprep.subr.mxu0 0.0
        %986 = vmatpush1.xpose.msra.mxu0 0.0
        %987 = vmatprep.subr.mxu0 0.0
        %988 = vmatpush1.xpose.msra.mxu0 0.0
        %989 = vmatprep.subr.mxu0 0.0
        %990 = vmatpush1.xpose.msra.mxu0 0.0
        %991 = vmatprep.subr.mxu0 0.0
        %992 = vmatpush1.xpose.msra.mxu0 0.0
        %993 = vmatprep.subr.mxu0 0.0
        %994 = vmatpush1.xpose.msra.mxu0 0.0
        %995 = vmatprep.subr.mxu0 0.0
        %996 = vmatpush1.xpose.msra.mxu0 0.0
        %997 = vmatprep.subr.mxu0 0.0
        %998 = vmatpush1.xpose.msra.mxu0 0.0
        %999 = vmatprep.subr.mxu0 0.0
        %1000 = vmatpush1.xpose.msra.mxu0 0.0
        %1001 = vmatprep.subr.mxu0 0.0
        %1002 = vmatpush1.xpose.msra.mxu0 0.0
        %1003 = vmatprep.subr.mxu0 0.0
        %1004 = vmatpush1.xpose.msra.mxu0 0.0
        %1005 = vmatprep.subr.mxu0 0.0
        %1006 = vmatpush1.xpose.msra.mxu0 0.0
        %1007 = vmatprep.subr.mxu0 0.0
        %1008 = vmatpush1.xpose.msra.mxu0 0.0
        %1009 = vmatprep.subr.mxu0 0.0
        %1010 = vmatpush1.xpose.msra.mxu0 0.0
        %1011 = vmatprep.subr.mxu0 0.0
        %1012 = vmatpush1.xpose.msra.mxu0 0.0
        %1013 = vmatprep.mubr.f32.mxu0 0.0
        %1014 = vmatmul.mubr.f32.gmra.mrb[0].mxu0 %v941
        %v1015 = vpop.f32.mrb[0].mxu0
        %v1016 = vadd.f32 0.0, %v1015
        %v1017 = vpop.f32.mrb[0].mxu0
        %1018 = vdwg.mxu0
        %v1019 = vmul.f32 %v1016, 0.35355338
        %vm1020 = vcmask 130048
        %1021 = vst.msk [vmem:[%s725] sm:$0xff] %vm1020, %v1019
        %v1022 = vld [vmem:[#allocation3] sm:$0xff]
        %v1023 = vsel %vm1020, %v1019, -inf
        %1024 = vmax.xlane.f32.xlu0 %v1023
        %v1025 = vpop.xlane.xlu0 %1024
        %v1026 = vmax.f32 %v1022, %v1025
        %v1027 = vsub.f32 %v1022, %v1026
        %v1028 = vmul.f32 %v1027, 1.442695
        %v1029 = vpow.pop %v1028
        %1031 = vset.pattern.permute.xlu0 0
        %1032 = vperm.xlu0 %1031, %v1026
        %v1033 = vpop.permute.xlu0 %1032
        %v1035 = vsub.f32 %v1019, %v1033
        %v1036 = vmul.f32 %v1035, 1.442695
        %v1037 = vpow.pop %v1036
        %v1038 = vld [vmem:[#allocation4] sm:$0xff]
        %v1039 = vmul.f32 %v1029, %v1038
        %v1040 = vsel %vm1020, %v1037, 0.0
        %1041 = vadd.xlane.f32.xlu0 %v1040
        %v1042 = vpop.xlane.xlu0 %1041
        %v1043 = vadd.f32 %v1039, %v1042
        %vm1044 = vcmask 7168
        %1045 = vst.msk [vmem:[#allocation4] sm:$0xff] %vm1044, %v1043
        %v1046 = vld [vmem:[#allocation5] sm:$0xff]
        %1048 = vset.pattern.permute.xlu0 0
        %1049 = vperm.xlu0 %1048, %v1029
        %v1050 = vpop.permute.xlu0 %1049
        %v1052 = vmul.f32 %v1050, %v1046
        %v1054 = vsel %vm1020, %v1037, 0
        %1056 = vmatprep.subr.mxu0 0.0
        %1057 = vmatpush1.msra.mxu0 %v932
        %1058 = vmatprep.subr.mxu0 0.0
        %1059 = vmatpush1.msra.mxu0 %v935
        %1060 = vmatprep.subr.mxu0 0.0
        %1061 = vmatpush1.msra.mxu0 0.0
        %1062 = vmatprep.subr.mxu0 0.0
        %1063 = vmatpush1.msra.mxu0 0.0
        %1064 = vmatprep.subr.mxu0 0.0
        %1065 = vmatpush1.msra.mxu0 0.0
        %1066 = vmatprep.subr.mxu0 0.0
        %1067 = vmatpush1.msra.mxu0 0.0
        %1068 = vmatprep.subr.mxu0 0.0
        %1069 = vmatpush1.msra.mxu0 0.0
        %1070 = vmatprep.subr.mxu0 0.0
        %1071 = vmatpush1.msra.mxu0 0.0
        %1072 = vmatprep.subr.mxu0 0.0
        %1073 = vmatpush1.msra.mxu0 0.0
        %1074 = vmatprep.subr.mxu0 0.0
        %1075 = vmatpush1.msra.mxu0 0.0
        %1076 = vmatprep.subr.mxu0 0.0
        %1077 = vmatpush1.msra.mxu0 0.0
        %1078 = vmatprep.subr.mxu0 0.0
        %1079 = vmatpush1.msra.mxu0 0.0
        %1080 = vmatprep.subr.mxu0 0.0
        %1081 = vmatpush1.msra.mxu0 0.0
        %1082 = vmatprep.subr.mxu0 0.0
        %1083 = vmatpush1.msra.mxu0 0.0
        %1084 = vmatprep.subr.mxu0 0.0
        %1085 = vmatpush1.msra.mxu0 0.0
        %1086 = vmatprep.subr.mxu0 0.0
        %1087 = vmatpush1.msra.mxu0 0.0
        %1088 = vmatprep.subr.mxu0 0.0
        %1089 = vmatpush1.msra.mxu0 0.0
        %1090 = vmatprep.subr.mxu0 0.0
        %1091 = vmatpush1.msra.mxu0 0.0
        %1092 = vmatprep.subr.mxu0 0.0
        %1093 = vmatpush1.msra.mxu0 0.0
        %1094 = vmatprep.subr.mxu0 0.0
        %1095 = vmatpush1.msra.mxu0 0.0
        %1096 = vmatprep.subr.mxu0 0.0
        %1097 = vmatpush1.msra.mxu0 0.0
        %1098 = vmatprep.subr.mxu0 0.0
        %1099 = vmatpush1.msra.mxu0 0.0
        %1100 = vmatprep.subr.mxu0 0.0
        %1101 = vmatpush1.msra.mxu0 0.0
        %1102 = vmatprep.subr.mxu0 0.0
        %1103 = vmatpush1.msra.mxu0 0.0
        %1104 = vmatprep.subr.mxu0 0.0
        %1105 = vmatpush1.msra.mxu0 0.0
        %1106 = vmatprep.subr.mxu0 0.0
        %1107 = vmatpush1.msra.mxu0 0.0
        %1108 = vmatprep.subr.mxu0 0.0
        %1109 = vmatpush1.msra.mxu0 0.0
        %1110 = vmatprep.subr.mxu0 0.0
        %1111 = vmatpush1.msra.mxu0 0.0
        %1112 = vmatprep.subr.mxu0 0.0
        %1113 = vmatpush1.msra.mxu0 0.0
        %1114 = vmatprep.subr.mxu0 0.0
        %1115 = vmatpush1.msra.mxu0 0.0
        %1116 = vmatprep.subr.mxu0 0.0
        %1117 = vmatpush1.msra.mxu0 0.0
        %1118 = vmatprep.subr.mxu0 0.0
        %1119 = vmatpush1.msra.mxu0 0.0
        %1120 = vmatprep.mubr.f32.mxu0 0.0
        %1121 = vmatmul.mubr.f32.gmra.mrb[0].mxu0 %v1054
        %v1122 = vpop.f32.mrb[0].mxu0
        %v1123 = vadd.f32 0.0, %v1122
        %v1124 = vpop.f32.mrb[0].mxu0
        %1125 = vdwg.mxu0
        %v1126 = vadd.f32 %v1052, %v1123
        %1127 = vst.msk [vmem:[#allocation5] sm:$0xff] %vm939, %v1126
        %1128 = vst.msk [vmem:[#allocation3] sm:$0xff] %vm1044, %v1026
        %v1129 = vld [vmem:[#allocation2] sm:$0xff]
        %1131 = vrot.lane.b32.xlu0 %v1129, 120
        %v1132 = vpop.permute.xlu0 %1131
        %1133 = vrot.lane.b32.xlu0 %v878, 120
        %v1134 = vpop.permute.xlu0 %1133
        %1135 = vrot.lane.b32.xlu0 %v881, 120
        %v1136 = vpop.permute.xlu0 %1135
        %v1137 = vsel %vm939, %v1132, 0
        %v1139 = vsel %vm939, %v1134, 0
        %v1141 = vsel %vm939, %v1136, 0
        %1143 = vmatprep.subr.mxu0 0.0
        %1144 = vmatpush1.xpose.msra.mxu0 %v1139
        %1145 = vmatprep.subr.mxu0 0.0
        %1146 = vmatpush1.xpose.msra.mxu0 %v1141
        %1147 = vmatprep.subr.mxu0 0.0
        %1148 = vmatpush1.xpose.msra.mxu0 0.0
        %1149 = vmatprep.subr.mxu0 0.0
        %1150 = vmatpush1.xpose.msra.mxu0 0.0
        %1151 = vmatprep.subr.mxu0 0.0
        %1152 = vmatpush1.xpose.msra.mxu0 0.0
        %1153 = vmatprep.subr.mxu0 0.0
        %1154 = vmatpush1.xpose.msra.mxu0 0.0
        %1155 = vmatprep.subr.mxu0 0.0
        %1156 = vmatpush1.xpose.msra.mxu0 0.0
        %1157 = vmatprep.subr.mxu0 0.0
        %1158 = vmatpush1.xpose.msra.mxu0 0.0
        %1159 = vmatprep.subr.mxu0 0.0
        %1160 = vmatpush1.xpose.msra.mxu0 0.0
        %1161 = vmatprep.subr.mxu0 0.0
        %1162 = vmatpush1.xpose.msra.mxu0 0.0
        %1163 = vmatprep.subr.mxu0 0.0
        %1164 = vmatpush1.xpose.msra.mxu0 0.0
        %1165 = vmatprep.subr.mxu0 0.0
        %1166 = vmatpush1.xpose.msra.mxu0 0.0
        %1167 = vmatprep.subr.mxu0 0.0
        %1168 = vmatpush1.xpose.msra.mxu0 0.0
        %1169 = vmatprep.subr.mxu0 0.0
        %1170 = vmatpush1.xpose.msra.mxu0 0.0
        %1171 = vmatprep.subr.mxu0 0.0
        %1172 = vmatpush1.xpose.msra.mxu0 0.0
        %1173 = vmatprep.subr.mxu0 0.0
        %1174 = vmatpush1.xpose.msra.mxu0 0.0
        %1175 = vmatprep.subr.mxu0 0.0
        %1176 = vmatpush1.xpose.msra.mxu0 0.0
        %1177 = vmatprep.subr.mxu0 0.0
        %1178 = vmatpush1.xpose.msra.mxu0 0.0
        %1179 = vmatprep.subr.mxu0 0.0
        %1180 = vmatpush1.xpose.msra.mxu0 0.0
        %1181 = vmatprep.subr.mxu0 0.0
        %1182 = vmatpush1.xpose.msra.mxu0 0.0
        %1183 = vmatprep.subr.mxu0 0.0
        %1184 = vmatpush1.xpose.msra.mxu0 0.0
        %1185 = vmatprep.subr.mxu0 0.0
        %1186 = vmatpush1.xpose.msra.mxu0 0.0
        %1187 = vmatprep.subr.mxu0 0.0
        %1188 = vmatpush1.xpose.msra.mxu0 0.0
        %1189 = vmatprep.subr.mxu0 0.0
        %1190 = vmatpush1.xpose.msra.mxu0 0.0
        %1191 = vmatprep.subr.mxu0 0.0
        %1192 = vmatpush1.xpose.msra.mxu0 0.0
        %1193 = vmatprep.subr.mxu0 0.0
        %1194 = vmatpush1.xpose.msra.mxu0 0.0
        %1195 = vmatprep.subr.mxu0 0.0
        %1196 = vmatpush1.xpose.msra.mxu0 0.0
        %1197 = vmatprep.subr.mxu0 0.0
        %1198 = vmatpush1.xpose.msra.mxu0 0.0
        %1199 = vmatprep.subr.mxu0 0.0
        %1200 = vmatpush1.xpose.msra.mxu0 0.0
        %1201 = vmatprep.subr.mxu0 0.0
        %1202 = vmatpush1.xpose.msra.mxu0 0.0
        %1203 = vmatprep.subr.mxu0 0.0
        %1204 = vmatpush1.xpose.msra.mxu0 0.0
        %1205 = vmatprep.subr.mxu0 0.0
        %1206 = vmatpush1.xpose.msra.mxu0 0.0
        %1207 = vmatprep.mubr.f32.mxu0 0.0
        %1208 = vmatmul.mubr.f32.gmra.mrb[0].mxu0 %v1137
        %v1209 = vpop.f32.mrb[0].mxu0
        %v1210 = vadd.f32 0.0, %v1209
        %v1211 = vpop.f32.mrb[0].mxu0
        %1212 = vdwg.mxu0
        %v1213 = vmul.f32 %v1210, 0.35355338
        %s1214 = scalar_lea.vmem %s725, 8 [#allocation28]
        %1215 = vst.msk [vmem:[%s1214] sm:$0xff] %vm1020, %v1213
        %v1216 = vld [vmem:[#allocation3] sm:$0xff]
        %v1217 = vsel %vm1020, %v1213, -inf
        %1218 = vmax.xlane.f32.xlu0 %v1217
        %v1219 = vpop.xlane.xlu0 %1218
        %v1220 = vmax.f32 %v1216, %v1219
        %v1221 = vsub.f32 %v1216, %v1220
        %v1222 = vmul.f32 %v1221, 1.442695
        %v1223 = vpow.pop %v1222
        %1225 = vset.pattern.permute.xlu0 1
        %1226 = vperm.xlu0 %1225, %v1220
        %v1227 = vpop.permute.xlu0 %1226
        %v1229 = vsub.f32 %v1213, %v1227
        %v1230 = vmul.f32 %v1229, 1.442695
        %v1231 = vpow.pop %v1230
        %v1232 = vld [vmem:[#allocation4] sm:$0xff]
        %v1233 = vmul.f32 %v1223, %v1232
        %v1234 = vsel %vm1020, %v1231, 0.0
        %1235 = vadd.xlane.f32.xlu0 %v1234
        %v1236 = vpop.xlane.xlu0 %1235
        %v1237 = vadd.f32 %v1233, %v1236
        %vm1238 = vcmask 15368
        %1239 = vst.msk [vmem:[#allocation4] sm:$0xff] %vm1238, %v1237
        %v1240 = vld [vmem:[#allocation5] sm:$0xff]
        %1242 = vset.pattern.permute.xlu0 1
        %1243 = vperm.xlu0 %1242, %v1223
        %v1244 = vpop.permute.xlu0 %1243
        %v1246 = vmul.f32 %v1244, %v1240
        %1249 = vrot.lane.b32.xlu0 %v932, 120
        %v1250 = vpop.permute.xlu0 %1249
        %1251 = vrot.lane.b32.xlu0 %v935, 120
        %v1252 = vpop.permute.xlu0 %1251
        %v1256 = vsel %vm1020, %v1231, 0
        %1258 = vmatprep.subr.mxu0 0.0
        %1259 = vmatpush1.msra.mxu0 %v1250
        %1260 = vmatprep.subr.mxu0 0.0
        %1261 = vmatpush1.msra.mxu0 %v1252
        %1262 = vmatprep.subr.mxu0 0.0
        %1263 = vmatpush1.msra.mxu0 0.0
        %1264 = vmatprep.subr.mxu0 0.0
        %1265 = vmatpush1.msra.mxu0 0.0
        %1266 = vmatprep.subr.mxu0 0.0
        %1267 = vmatpush1.msra.mxu0 0.0
        %1268 = vmatprep.subr.mxu0 0.0
        %1269 = vmatpush1.msra.mxu0 0.0
        %1270 = vmatprep.subr.mxu0 0.0
        %1271 = vmatpush1.msra.mxu0 0.0
        %1272 = vmatprep.subr.mxu0 0.0
        %1273 = vmatpush1.msra.mxu0 0.0
        %1274 = vmatprep.subr.mxu0 0.0
        %1275 = vmatpush1.msra.mxu0 0.0
        %1276 = vmatprep.subr.mxu0 0.0
        %1277 = vmatpush1.msra.mxu0 0.0
        %1278 = vmatprep.subr.mxu0 0.0
        %1279 = vmatpush1.msra.mxu0 0.0
        %1280 = vmatprep.subr.mxu0 0.0
        %1281 = vmatpush1.msra.mxu0 0.0
        %1282 = vmatprep.subr.mxu0 0.0
        %1283 = vmatpush1.msra.mxu0 0.0
        %1284 = vmatprep.subr.mxu0 0.0
        %1285 = vmatpush1.msra.mxu0 0.0
        %1286 = vmatprep.subr.mxu0 0.0
        %1287 = vmatpush1.msra.mxu0 0.0
        %1288 = vmatprep.subr.mxu0 0.0
        %1289 = vmatpush1.msra.mxu0 0.0
        %1290 = vmatprep.subr.mxu0 0.0
        %1291 = vmatpush1.msra.mxu0 0.0
        %1292 = vmatprep.subr.mxu0 0.0
        %1293 = vmatpush1.msra.mxu0 0.0
        %1294 = vmatprep.subr.mxu0 0.0
        %1295 = vmatpush1.msra.mxu0 0.0
        %1296 = vmatprep.subr.mxu0 0.0
        %1297 = vmatpush1.msra.mxu0 0.0
        %1298 = vmatprep.subr.mxu0 0.0
        %1299 = vmatpush1.msra.mxu0 0.0
        %1300 = vmatprep.subr.mxu0 0.0
        %1301 = vmatpush1.msra.mxu0 0.0
        %1302 = vmatprep.subr.mxu0 0.0
        %1303 = vmatpush1.msra.mxu0 0.0
        %1304 = vmatprep.subr.mxu0 0.0
        %1305 = vmatpush1.msra.mxu0 0.0
        %1306 = vmatprep.subr.mxu0 0.0
        %1307 = vmatpush1.msra.mxu0 0.0
        %1308 = vmatprep.subr.mxu0 0.0
        %1309 = vmatpush1.msra.mxu0 0.0
        %1310 = vmatprep.subr.mxu0 0.0
        %1311 = vmatpush1.msra.mxu0 0.0
        %1312 = vmatprep.subr.mxu0 0.0
        %1313 = vmatpush1.msra.mxu0 0.0
        %1314 = vmatprep.subr.mxu0 0.0
        %1315 = vmatpush1.msra.mxu0 0.0
        %1316 = vmatprep.subr.mxu0 0.0
        %1317 = vmatpush1.msra.mxu0 0.0
        %1318 = vmatprep.subr.mxu0 0.0
        %1319 = vmatpush1.msra.mxu0 0.0
        %1320 = vmatprep.subr.mxu0 0.0
        %1321 = vmatpush1.msra.mxu0 0.0
        %1322 = vmatprep.mubr.f32.mxu0 0.0
        %1323 = vmatmul.mubr.f32.gmra.mrb[0].mxu0 %v1256
        %v1324 = vpop.f32.mrb[0].mxu0
        %v1325 = vadd.f32 0.0, %v1324
        %v1326 = vpop.f32.mrb[0].mxu0
        %1327 = vdwg.mxu0
        %1329 = vrot.lane.b32.xlu0 %v1325, 8
        %v1330 = vpop.permute.xlu0 %1329
        %v1332 = vadd.f32 %v1246, %v1330
        %vm1333 = vcmask 130112
        %1334 = vst.msk [vmem:[#allocation5] sm:$0xff] %vm1333, %v1332
        %1335 = vst.msk [vmem:[#allocation3] sm:$0xff] %vm1238, %v1220
        // Predicated region
        $region129: #{tpu_custom_call.1} parent=71 // pred_check
          %p1336 = pneg %p734
        $region130: #{tpu_custom_call.1} parent=71 // pred_check_branch
          %1338 = sbr.rel (%p1336) target = $region132
        $region131: #{tpu_custom_call.1} parent=71 // pred_region
          %v1339 = vld [vmem:[#allocation4] sm:$0xff]
          %v1340 = vrcp.pop %v1339
          %v1341 = vld [vmem:[#allocation5] sm:$0xff]
          %1343 = vset.pattern.permute.xlu0 0
          %1344 = vperm.xlu0 %1343, %v1340
          %v1345 = vpop.permute.xlu0 %1344
          %v1347 = vmul.f32 %v1341, %v1345
          %1348 = vst.msk [vmem:[#allocation5] sm:$0xff] %vm939, %v1347
          %v1349 = vld [vmem:[#allocation5] sm:$0xff]
          %1350 = vset.pattern.permute.xlu0 1
          %1351 = vperm.xlu0 %1350, %v1340
          %v1352 = vpop.permute.xlu0 %1351
          %v1354 = vmul.f32 %v1349, %v1352
          %1355 = vst.msk [vmem:[#allocation5] sm:$0xff] %vm1333, %v1354
          %v1356 = vld [vmem:[#allocation5] sm:$0xff]
          %v1357 = vpack.c.bf16 %v1356, %v1356
          %v1358 = vld [vmem:[#allocation15] sm:$0xf]
          %v1359 = vld [vmem:[#allocation15 + $0x4] sm:$0xf]
          %v1360 = vld [vmem:[#allocation17] sm:$0x1]
          %v1362 = vlaneseq
          %v1363 = vshrl.u32 %v1362, 7
          %v1364 = vsub.s32 0, %v1363
          %v1365 = vrot.slane %v1360, %v1364
          %v1369 = vunpack.c.l.b16 %v1358
          %v1370 = vunpack.c.l.b16 %v1359
          %v1371 = vpack.c.b16 %v1370, %v1369
          %v1374 = vsel %vm1020, %v1357, 0
          %1376 = vmatprep.subr.bf16.mxu0 0
          %1377 = vmatpush1.bf16.msra.mxu0 %v1371
          %1378 = vmatprep.subr.bf16.mxu0 0
          %1379 = vmatpush1.bf16.msra.mxu0 0
          %1380 = vmatprep.subr.bf16.mxu0 0
          %1381 = vmatpush1.bf16.msra.mxu0 0
          %1382 = vmatprep.subr.bf16.mxu0 0
          %1383 = vmatpush1.bf16.msra.mxu0 0
          %1384 = vmatprep.subr.bf16.mxu0 0
          %1385 = vmatpush1.bf16.msra.mxu0 0
          %1386 = vmatprep.subr.bf16.mxu0 0
          %1387 = vmatpush1.bf16.msra.mxu0 0
          %1388 = vmatprep.subr.bf16.mxu0 0
          %1389 = vmatpush1.bf16.msra.mxu0 0
          %1390 = vmatprep.subr.bf16.mxu0 0
          %1391 = vmatpush1.bf16.msra.mxu0 0
          %1392 = vmatprep.subr.bf16.mxu0 0
          %1393 = vmatpush1.bf16.msra.mxu0 0
          %1394 = vmatprep.subr.bf16.mxu0 0
          %1395 = vmatpush1.bf16.msra.mxu0 0
          %1396 = vmatprep.subr.bf16.mxu0 0
          %1397 = vmatpush1.bf16.msra.mxu0 0
          %1398 = vmatprep.subr.bf16.mxu0 0
          %1399 = vmatpush1.bf16.msra.mxu0 0
          %1400 = vmatprep.subr.bf16.mxu0 0
          %1401 = vmatpush1.bf16.msra.mxu0 0
          %1402 = vmatprep.subr.bf16.mxu0 0
          %1403 = vmatpush1.bf16.msra.mxu0 0
          %1404 = vmatprep.subr.bf16.mxu0 0
          %1405 = vmatpush1.bf16.msra.mxu0 0
          %1406 = vmatprep.subr.bf16.mxu0 0
          %1407 = vmatpush1.bf16.msra.mxu0 0
          %1408 = vmatprep.mubr.bf16.mxu0 0
          %1409 = vmatmul.mubr.bf16.gmra.mrb[0].mxu0 %v1374
          %v1410 = vpop.f32.mrb[0].mxu0
          %v1411 = vadd.f32 %v1365, %v1410
          %v1412 = vpop.f32.mrb[0].mxu0
          %v1413 = vpop.f32.mrb[0].mxu0
          %v1414 = vpop.f32.mrb[0].mxu0
          %1415 = vdwg.mxu0
          %v1416 = vld [vmem:[#allocation18] sm:$0x3]
          %v1417 = vld [vmem:[#allocation20] sm:$0x3]
          %v1418 = vld [vmem:[%s608] sm:$0xff]
          %v1419 = vadd.f32 %v1418, %v1411
          %v1420 = vsel %vm839, %v1419, 0.0
          %1421 = vadd.xlane.f32.xlu0 %v1420
          %v1422 = vpop.xlane.xlu0 %1421
          %v1423 = vrcp.pop 32.0
          %v1424 = vmul.f32 %v1422, %v1423
          %v1425 = vsub.f32 %v1419, %v1424
          %v1426 = vmul.f32 %v1425, %v1425
          %v1427 = vsel %vm839, %v1426, 0.0
          %1428 = vadd.xlane.f32.xlu0 %v1427
          %v1429 = vpop.xlane.xlu0 %1428
          %v1430 = vmul.f32 %v1429, %v1423
          %v1431 = vadd.f32 %v1430, 1e-05
          %v1432 = vrsqrt.pop %v1431
          %v1433 = vmul.f32 %v1425, %v1432
          %v1434 = vlaneseq
          %v1435 = vshrl.u32 %v1434, 7
          %v1436 = vsub.s32 0, %v1435
          %v1437 = vrot.slane %v1416, %v1436
          %v1438 = vmul.f32 %v1433, %v1437
          %v1439 = vlaneseq
          %v1440 = vshrl.u32 %v1439, 7
          %v1441 = vsub.s32 0, %v1440
          %v1442 = vrot.slane %v1417, %v1441
          %v1443 = vadd.f32 %v1438, %v1442
          %v1444 = vpack.c.bf16 %v1443, %v1443
          %v1445 = vld [vmem:[#allocation21] sm:$0xf]
          %v1446 = vld [vmem:[#allocation21 + $0x4] sm:$0xf]
          %v1447 = vld [vmem:[#allocation21 + $0x8] sm:$0xf]
          %v1448 = vld [vmem:[#allocation21 + $0xc] sm:$0xf]
          %v1449 = vld [vmem:[#allocation23] sm:$0x1]
          %v1451 = vlaneseq
          %v1452 = vshrl.u32 %v1451, 7
          %v1453 = vsub.s32 0, %v1452
          %v1454 = vrot.slane %v1449, %v1453
          %v1460 = vunpack.c.l.b16 %v1445
          %v1461 = vunpack.c.l.b16 %v1446
          %v1462 = vunpack.c.l.b16 %v1447
          %v1463 = vunpack.c.l.b16 %v1448
          %v1464 = vpack.c.b16 %v1461, %v1460
          %v1465 = vpack.c.b16 %v1463, %v1462
          %v1469 = vsel %vm839, %v1444, 0
          %1471 = vmatprep.subr.bf16.mxu0 0
          %1472 = vmatpush1.bf16.msra.mxu0 %v1464
          %1473 = vmatprep.subr.bf16.mxu0 0
          %1474 = vmatpush1.bf16.msra.mxu0 %v1465
          %1475 = vmatprep.subr.bf16.mxu0 0
          %1476 = vmatpush1.bf16.msra.mxu0 0
          %1477 = vmatprep.subr.bf16.mxu0 0
          %1478 = vmatpush1.bf16.msra.mxu0 0
          %1479 = vmatprep.subr.bf16.mxu0 0
          %1480 = vmatpush1.bf16.msra.mxu0 0
          %1481 = vmatprep.subr.bf16.mxu0 0
          %1482 = vmatpush1.bf16.msra.mxu0 0
          %1483 = vmatprep.subr.bf16.mxu0 0
          %1484 = vmatpush1.bf16.msra.mxu0 0
          %1485 = vmatprep.subr.bf16.mxu0 0
          %1486 = vmatpush1.bf16.msra.mxu0 0
          %1487 = vmatprep.subr.bf16.mxu0 0
          %1488 = vmatpush1.bf16.msra.mxu0 0
          %1489 = vmatprep.subr.bf16.mxu0 0
          %1490 = vmatpush1.bf16.msra.mxu0 0
          %1491 = vmatprep.subr.bf16.mxu0 0
          %1492 = vmatpush1.bf16.msra.mxu0 0
          %1493 = vmatprep.subr.bf16.mxu0 0
          %1494 = vmatpush1.bf16.msra.mxu0 0
          %1495 = vmatprep.subr.bf16.mxu0 0
          %1496 = vmatpush1.bf16.msra.mxu0 0
          %1497 = vmatprep.subr.bf16.mxu0 0
          %1498 = vmatpush1.bf16.msra.mxu0 0
          %1499 = vmatprep.subr.bf16.mxu0 0
          %1500 = vmatpush1.bf16.msra.mxu0 0
          %1501 = vmatprep.subr.bf16.mxu0 0
          %1502 = vmatpush1.bf16.msra.mxu0 0
          %1503 = vmatprep.mubr.bf16.mxu0 0
          %1504 = vmatmul.mubr.bf16.gmra.mrb[0].mxu0 %v1469
          %v1505 = vpop.f32.mrb[0].mxu0
          %v1506 = vadd.f32 %v1454, %v1505
          %v1507 = vpop.f32.mrb[0].mxu0
          %v1508 = vpop.f32.mrb[0].mxu0
          %v1509 = vpop.f32.mrb[0].mxu0
          %1510 = vdwg.mxu0
          %v1511 = vmax.f32 %v1506, 0.0
          %v1512 = vpack.c.bf16 %v1511, %v1511
          %v1513 = vld [vmem:[#allocation24] sm:$0xf]
          %v1514 = vld [vmem:[#allocation24 + $0x4] sm:$0xf]
          %v1515 = vld [vmem:[#allocation24 + $0x8] sm:$0xf]
          %v1516 = vld [vmem:[#allocation24 + $0xc] sm:$0xf]
          %v1517 = vld [vmem:[#allocation24 + $0x10] sm:$0xf]
          %v1518 = vld [vmem:[#allocation24 + $0x14] sm:$0xf]
          %v1519 = vld [vmem:[#allocation24 + $0x18] sm:$0xf]
          %v1520 = vld [vmem:[#allocation24 + $0x1c] sm:$0xf]
          %v1521 = vld [vmem:[#allocation26] sm:$0x1]
          %v1523 = vlaneseq
          %v1524 = vshrl.u32 %v1523, 7
          %v1525 = vsub.s32 0, %v1524
          %v1526 = vrot.slane %v1521, %v1525
          %v1536 = vunpack.c.l.b16 %v1513
          %v1537 = vunpack.c.l.b16 %v1514
          %v1538 = vunpack.c.l.b16 %v1515
          %v1539 = vunpack.c.l.b16 %v1516
          %v1540 = vunpack.c.l.b16 %v1517
          %v1541 = vunpack.c.l.b16 %v1518
          %v1542 = vunpack.c.l.b16 %v1519
          %v1543 = vunpack.c.l.b16 %v1520
          %v1544 = vpack.c.b16 %v1537, %v1536
          %v1545 = vpack.c.b16 %v1539, %v1538
          %v1546 = vpack.c.b16 %v1541, %v1540
          %v1547 = vpack.c.b16 %v1543, %v1542
          %vm1552 = vcmask 523264
          %v1554 = vsel %vm1552, %v1512, 0
          %1556 = vmatprep.subr.bf16.mxu0 0
          %1557 = vmatpush1.bf16.msra.mxu0 %v1544
          %1558 = vmatprep.subr.bf16.mxu0 0
          %1559 = vmatpush1.bf16.msra.mxu0 %v1545
          %1560 = vmatprep.subr.bf16.mxu0 0
          %1561 = vmatpush1.bf16.msra.mxu0 %v1546
          %1562 = vmatprep.subr.bf16.mxu0 0
          %1563 = vmatpush1.bf16.msra.mxu0 %v1547
          %1564 = vmatprep.subr.bf16.mxu0 0
          %1565 = vmatpush1.bf16.msra.mxu0 0
          %1566 = vmatprep.subr.bf16.mxu0 0
          %1567 = vmatpush1.bf16.msra.mxu0 0
          %1568 = vmatprep.subr.bf16.mxu0 0
          %1569 = vmatpush1.bf16.msra.mxu0 0
          %1570 = vmatprep.subr.bf16.mxu0 0
          %1571 = vmatpush1.bf16.msra.mxu0 0
          %1572 = vmatprep.subr.bf16.mxu0 0
          %1573 = vmatpush1.bf16.msra.mxu0 0
          %1574 = vmatprep.subr.bf16.mxu0 0
          %1575 = vmatpush1.bf16.msra.mxu0 0
          %1576 = vmatprep.subr.bf16.mxu0 0
          %1577 = vmatpush1.bf16.msra.mxu0 0
          %1578 = vmatprep.subr.bf16.mxu0 0
          %1579 = vmatpush1.bf16.msra.mxu0 0
          %1580 = vmatprep.subr.bf16.mxu0 0
          %1581 = vmatpush1.bf16.msra.mxu0 0
          %1582 = vmatprep.subr.bf16.mxu0 0
          %1583 = vmatpush1.bf16.msra.mxu0 0
          %1584 = vmatprep.subr.bf16.mxu0 0
          %1585 = vmatpush1.bf16.msra.mxu0 0
          %1586 = vmatprep.subr.bf16.mxu0 0
          %1587 = vmatpush1.bf16.msra.mxu0 0
          %1588 = vmatprep.mubr.bf16.mxu0 0
          %1589 = vmatmul.mubr.bf16.gmra.mrb[0].mxu0 %v1554
          %v1590 = vpop.f32.mrb[0].mxu0
          %v1591 = vadd.f32 %v1526, %v1590
          %v1592 = vpop.f32.mrb[0].mxu0
          %v1593 = vpop.f32.mrb[0].mxu0
          %v1594 = vpop.f32.mrb[0].mxu0
          %1595 = vdwg.mxu0
          %v1596 = vadd.f32 %v1443, %v1591
          %v1597 = vsel %vm839, %v1596, 0.0
          %1598 = vadd.xlane.f32.xlu0 %v1597
          %v1599 = vpop.xlane.xlu0 %1598
          %v1600 = vmul.f32 %v1599, %v1423
          %v1601 = vsub.f32 %v1596, %v1600
          %v1602 = vmul.f32 %v1601, %v1601
          %v1603 = vsel %vm839, %v1602, 0.0
          %1604 = vadd.xlane.f32.xlu0 %v1603
          %v1605 = vpop.xlane.xlu0 %1604
          %v1606 = vmul.f32 %v1605, %v1423
          %v1607 = vadd.f32 %v1606, 1e-05
          %v1608 = vrsqrt.pop %v1607
          %v1609 = vmul.f32 %v1601, %v1608
          %v1610 = vlaneseq
          %v1611 = vshrl.u32 %v1610, 7
          %v1612 = vsub.s32 1, %v1611
          %v1613 = vrot.slane %v1416, %v1612
          %v1614 = vmul.f32 %v1609, %v1613
          %v1615 = vlaneseq
          %v1616 = vshrl.u32 %v1615, 7
          %v1617 = vsub.s32 1, %v1616
          %v1618 = vrot.slane %v1417, %v1617
          %v1619 = vadd.f32 %v1614, %v1618
          %1620 = vst.msk [vmem:[%s718] sm:$0xff] %vm839, %v1619
        $region132: #{tpu_custom_call.1} parent=71 // pred_fallthru
          _
        %s1621 = sand.u32 %s355, 1
        %s1622 = scalar_lea.sflag [#allocation8], %s1621
        %s1623 = sand.u32 %s355, 1
        %s1624 = smul.addr %s1623, 8
        %s1625 = scalar_lea.vmem [#allocation27], %s1624
        %s1626 = sand.u32 %s383, 1
        %s1627 = scalar_lea.sflag [#allocation29], %s1626
        %s1628 = sand.u32 %s383, 1
        %s1629 = smul.addr %s1628, 16
        %s1630 = scalar_lea.vmem [#allocation28], %s1629
        // Predicated region
        $region133: #{tpu_custom_call.1} parent=71 // pred_check
          %p1631 = pneg %p365
        $region134: #{tpu_custom_call.1} parent=71 // pred_check_branch
          %1633 = sbr.rel (%p1631) target = $region136
        $region135: #{tpu_custom_call.1} parent=71 // pred_region
          %s1635 = ssub.s32 128, 128
          %1636 = vsyncadd %s1622, %s1635
          %s1637 = smul.addr %s47, 128
          %s1638 = scalar_lea.hbm %s13, %s1637
          %s1640 = sshll.u32 %s1625, 4
          %s1641 = int_to_ptr.vmem [resolvable:$true] %s1640
          %1643 = dma.vmem_to_hbm [thread:$0]  %s1641, 128, %s1638, %s1622
        $region136: #{tpu_custom_call.1} parent=71 // pred_fallthru
          _
        // Predicated region
        $region137: #{tpu_custom_call.1} parent=71 // pred_check
          %p1644 = pneg %p393
        $region138: #{tpu_custom_call.1} parent=71 // pred_check_branch
          %1646 = sbr.rel (%p1644) target = $region140
        $region139: #{tpu_custom_call.1} parent=71 // pred_region
          %s1648 = ssub.s32 256, 256
          %1649 = vsyncadd %s1627, %s1648
          %s1650 = smul.addr %s47, 2
          %s1651 = sadd.s32 %s48, %s1650
          %s1652 = smul.addr %s1651, 128
          %s1653 = scalar_lea.hbm %s14, %s1652
          %s1654 = sshll.u32 %s1630, 4
          %s1655 = int_to_ptr.vmem [resolvable:$true] %s1654
          %1660 = dma.vmem_to_hbm [thread:$0]  %s1655, 256, %s1653, %s1627, 128, 128, 8
        $region140: #{tpu_custom_call.1} parent=71 // pred_fallthru
          _
      $region72: #{tpu_custom_call.1} parent=5 // pred_fallthru
        _
      %p1661 = scmp.le.s32.totalorder 2, %s38
      // Predicated region
      $region141: #{tpu_custom_call.1} parent=5 // pred_check
        %p1662 = pneg %p1661
      $region142: #{tpu_custom_call.1} parent=5 // pred_check_branch
        %1664 = sbr.rel (%p1662) target = $region144
      $region143: #{tpu_custom_call.1} parent=5 // pred_region
        %s1665 = ssub.s32 %s38, 2
        // Predicated region
        $region145: #{tpu_custom_call.1} parent=143 // pred_check
          %p1666 = pneg %p371
        $region146: #{tpu_custom_call.1} parent=143 // pred_check_branch
          %1668 = sbr.rel (%p1666) target = $region148
        $region147: #{tpu_custom_call.1} parent=143 // pred_region
          %s1669 = sand.u32 %s356, 1
          %s1670 = scalar_lea.sflag [#allocation8], %s1669
          %s1671 = sand.u32 %s356, 1
          %s1672 = smul.addr %s1671, 8
          %s1673 = scalar_lea.vmem [#allocation27], %s1672
          %1674 = dma.done %s1670, 128
        $region148: #{tpu_custom_call.1} parent=143 // pred_fallthru
          _
        // Predicated region
        $region149: #{tpu_custom_call.1} parent=143 // pred_check
          %p1675 = pneg %p399
        $region150: #{tpu_custom_call.1} parent=143 // pred_check_branch
          %1677 = sbr.rel (%p1675) target = $region152
        $region151: #{tpu_custom_call.1} parent=143 // pred_region
          %s1678 = sand.u32 %s384, 1
          %s1679 = scalar_lea.sflag [#allocation29], %s1678
          %s1680 = sand.u32 %s384, 1
          %s1681 = smul.addr %s1680, 16
          %s1682 = scalar_lea.vmem [#allocation28], %s1681
          %1683 = dma.done %s1679, 256
        $region152: #{tpu_custom_call.1} parent=143 // pred_fallthru
          _
      $region144: #{tpu_custom_call.1} parent=5 // pred_fallthru
        _
    $region6: #{tpu_custom_call.1} parent=1 // loop_footer
      %s42 = sadd.s32 1, %s38
    $region7: #{tpu_custom_call.1} parent=1 // loop_footer_branch
      %37 = sbr.rel target = $region3
    $region8: #{tpu_custom_call.1} parent=1 // loop_exit
      _
    %1684 = vsyncpa [#allocation7], 1
    %s1685 = scalar_lea.sflag [#allocation7], 1
    %1686 = vsyncpa %s1685, 1
    %1687 = vsyncpa [#allocation10], 1
    %s1688 = scalar_lea.sflag [#allocation10], 1
    %1689 = vsyncpa %s1688, 1
    %1690 = vsyncpa [#allocation13], 1
    %1691 = vsyncpa [#allocation16], 1
    %1692 = vsyncpa [#allocation19], 1
    %1693 = vsyncpa [#allocation22], 1
    %1694 = vsyncpa [#allocation25], 1
    %1695 = vsyncpa [#allocation8], 1
    %s1696 = scalar_lea.sflag [#allocation8], 1
    %1697 = vsyncpa %s1696, 1
    %1698 = vsyncpa [#allocation29], 1
    %s1699 = scalar_lea.sflag [#allocation29], 1
    %1700 = vsyncpa %s1699, 1

</llo_original>
